<compile_context>
chip_gen: v7x
topology: tpu7x:2x2x1
jax: 0.10.0
libtpu: 0.0.40
codegen_flags: <defaults>
</compile_context>

<pallas_src>
import jax
import jax.numpy as jnp
from jax.experimental import pallas as pl
from jax.experimental.pallas import tpu as pltpu

LN_EPS = 1e-5  # PyTorch nn.LayerNorm default


def _round_up(x, m):
    return ((x + m - 1) // m) * m


def _layernorm(x, gamma, beta):
    # PyTorch LayerNorm over the last dim: biased variance, eps inside rsqrt.
    # fc1/fc2 are used un-padded, so mean/var run over the true feature count.
    mean = jnp.mean(x, axis=-1, keepdims=True)
    centered = x - mean
    var = jnp.mean(centered * centered, axis=-1, keepdims=True)
    inv = jax.lax.rsqrt(var + LN_EPS)
    return centered * inv * gamma + beta


def critic_kernel(state_ref, action_ref, w1_ref, w2_ref, wa_ref,
                  p1_ref, p2_ref, out_ref):
    cdt = w1_ref.dtype                       # matmul operand dtype (bf16)
    state = state_ref[...].astype(cdt)       # (TB, in_pad)
    action = action_ref[...].astype(cdt)     # (TB, na_pad)

    # packed f32 parameter slabs (static row slices within one sublane tile)
    b1, g1, be1 = p1_ref[0:1, :], p1_ref[1:2, :], p1_ref[2:3, :]
    b2, g2, be2 = p2_ref[0:1, :], p2_ref[1:2, :], p2_ref[2:3, :]
    ba, bq = p2_ref[3:4, :], p2_ref[5:6, 0:1]

    # fc1 -> LayerNorm -> ReLU   (bf16 MXU operands, f32 accumulate)
    sv = jnp.dot(state, w1_ref[...], preferred_element_type=jnp.float32) + b1
    sv = _layernorm(sv, g1, be1)
    sv = jnp.maximum(sv, 0.0)

    # fc2 -> LayerNorm
    sv = jnp.dot(sv.astype(cdt), w2_ref[...],
                 preferred_element_type=jnp.float32) + b2
    sv = _layernorm(sv, g2, be2)

    # action branch: Linear -> ReLU
    av = jnp.dot(action, wa_ref[...], preferred_element_type=jnp.float32) + ba
    av = jnp.maximum(av, 0.0)

    # combine, ReLU
    sav = jnp.maximum(sv + av, 0.0)          # (TB, fc2), f32

    # q head, lane-dense: contract fc2 of the (8, fc2) param slab against
    # sav's fc2 (NT matmul) -> (8, TB); row 4 is wq . sav.  The result is
    # produced lane-major, so the store below is an unmasked, dense vst.
    qh = jax.lax.dot_general(p2_ref[...], sav, (((1,), (1,)), ((), ())),
                             preferred_element_type=jnp.float32)
    out_ref[...] = qh[4:5, :] + bq           # (1, TB)


def _choose_tile(batch, block_b):
    """Sublane-aligned batch tile; >= 2 (even) grid steps when the batch
    allows so v7x can shard steps across its two TensorCores.  When the grid
    has more than one step the tile is a multiple of 128 so the lane-dense
    output block stays layout-legal."""
    b8 = _round_up(max(batch, 1), 8)
    steps = pl.cdiv(b8, block_b)
    if b8 >= 256:
        steps = max(steps, 2)
        if steps % 2:
            steps += 1
    if steps == 1:
        tb = b8
    else:
        tb = _round_up(pl.cdiv(b8, steps), 128)
    grid = pl.cdiv(batch, tb)
    return tb, grid


def critic_forward(state, action, params, *, block_b=1024):
    """state: (B, input_dim[_pad]), action: (B, n_actions[_pad]) -> (B, 1).

    Feature dims should already match the 8-aligned weight K dims (keep them
    pre-padded upstream); the jnp.pad below is only a correctness fallback.
    A ragged batch is handled by a partial final block, not by padding."""
    B = state.shape[0]
    in_pad, fc1 = params["w1"].shape
    na_pad, fc2 = params["wa"].shape

    if state.shape[1] != in_pad:     # fallback only — avoid in the hot path
        state = jnp.pad(state, ((0, 0), (0, in_pad - state.shape[1])))
    if action.shape[1] != na_pad:    # fallback only — avoid in the hot path
        action = jnp.pad(action, ((0, 0), (0, na_pad - action.shape[1])))

    tb, grid = _choose_tile(B, block_b)

    const2 = lambda i: (0, 0)
    in_specs = [
        pl.BlockSpec((tb, in_pad), lambda i: (i, 0)),    # state  (batch-tiled)
        pl.BlockSpec((tb, na_pad), lambda i: (i, 0)),    # action (batch-tiled)
        pl.BlockSpec(params["w1"].shape, const2),        # w1 (VMEM-resident)
        pl.BlockSpec(params["w2"].shape, const2),        # w2
        pl.BlockSpec(params["wa"].shape, const2),        # wa
        pl.BlockSpec(params["p1"].shape, const2),        # fc1 param slab
        pl.BlockSpec(params["p2"].shape, const2),        # fc2 param slab (+wq,bq)
    ]
    # Lane-dense output slab: one (1, tb) row of q values per grid step.
    out_specs = pl.BlockSpec((1, tb), lambda i: (0, i))

    param_bytes = sum(int(params[k].size) * params[k].dtype.itemsize
                      for k in ("w1", "w2", "wa", "p1", "p2"))
    act_bytes = (int(state.size) * state.dtype.itemsize
                 + int(action.size) * action.dtype.itemsize)
    cost = pl.CostEstimate(
        flops=2 * grid * tb * (in_pad * fc1 + fc1 * fc2 + na_pad * fc2 + 8 * fc2),
        transcendentals=2 * grid * tb,         # one rsqrt per row per LayerNorm
        bytes_accessed=act_bytes + param_bytes + 4 * grid * tb,
    )

    # Raise the scoped-VMEM limit only when this config actually needs more
    # than v5e's 16 MiB default (double-buffered I/O blocks + resident params
    # + live f32 intermediates).
    vmem_est = (2 * tb * (in_pad + na_pad) * 4
                + 2 * tb * 4
                + 2 * param_bytes
                + 4 * tb * max(fc1, fc2) * 4)
    vmem_limit = None
    if vmem_est > 16 * 1024 * 1024:
        vmem_limit = min(int(vmem_est * 5 // 4), 64 * 1024 * 1024)

    out = pl.pallas_call(
        critic_kernel,
        out_shape=jax.ShapeDtypeStruct((1, grid * tb), jnp.float32),
        grid=(grid,),
        in_specs=in_specs,
        out_specs=out_specs,
        compiler_params=pltpu.CompilerParams(
            dimension_semantics=("parallel",),
            vmem_limit_bytes=vmem_limit),
        cost_estimate=cost,
    )(state, action, params["w1"], params["w2"], params["wa"],
      params["p1"], params["p2"])
    return out[0, :B].reshape(B, 1)


def init_params(key, input_dim, fc1_dims, fc2_dims, n_actions,
                matmul_dtype=jnp.bfloat16):
    """Deterministic init mirroring the PyTorch module's __init__.

    f1/f2 use the OUT-features dim (weight.size()[0] of the (out,in) PyTorch
    weight); f3=0.003 for the q head; action_value uses PyTorch's default
    1/sqrt(fan_in).  Weights are stored pre-transposed (in, out), K dims are
    zero-padded to multiples of 8 once here (so the forward never pads), and
    the matmul weights are kept in `matmul_dtype` (bf16 for the MXU); all
    biases / LayerNorm params / q-head params stay f32 in two packed slabs."""
    ks = jax.random.split(key, 8)
    f1 = 1.0 / jnp.sqrt(jnp.float32(fc1_dims))
    f2 = 1.0 / jnp.sqrt(jnp.float32(fc2_dims))
    f3 = jnp.float32(0.003)
    fa = 1.0 / jnp.sqrt(jnp.float32(n_actions))

    u = lambda k, shape, b: jax.random.uniform(k, shape, jnp.float32, -b, b)

    in_pad = _round_up(input_dim, 8)
    na_pad = _round_up(n_actions, 8)

    w1 = jnp.zeros((in_pad, fc1_dims), jnp.float32)
    w1 = w1.at[:input_dim].set(u(ks[0], (input_dim, fc1_dims), f1))
    w2 = u(ks[2], (fc1_dims, fc2_dims), f2)
    wa = jnp.zeros((na_pad, fc2_dims), jnp.float32)
    wa = wa.at[:n_actions].set(u(ks[4], (n_actions, fc2_dims), fa))

    # fc1 slab: row0 = b1, row1 = LN1 gamma (ones), row2 = LN1 beta (zeros)
    p1 = jnp.zeros((8, fc1_dims), jnp.float32)
    p1 = p1.at[0].set(u(ks[1], (fc1_dims,), f1))
    p1 = p1.at[1].set(jnp.ones((fc1_dims,), jnp.float32))

    # fc2 slab: row0 = b2, row1 = LN2 gamma, row2 = LN2 beta,
    #           row3 = ba (action bias), row4 = wq (q weight), row5[0] = bq
    p2 = jnp.zeros((8, fc2_dims), jnp.float32)
    p2 = p2.at[0].set(u(ks[3], (fc2_dims,), f2))
    p2 = p2.at[1].set(jnp.ones((fc2_dims,), jnp.float32))
    p2 = p2.at[3].set(u(ks[5], (fc2_dims,), fa))
    p2 = p2.at[4].set(u(ks[6], (fc2_dims,), f3))
    p2 = p2.at[5, 0].set(u(ks[7], (), f3))

    return {
        "w1": w1.astype(matmul_dtype),
        "w2": w2.astype(matmul_dtype),
        "wa": wa.astype(matmul_dtype),
        "p1": p1,
        "p2": p2,
    }


def critic_ref(state, action, p):
    """Pure-JAX reference mirroring the kernel numerics (bf16 dot operands,
    f32 accumulation / LayerNorm / q head)."""
    cdt = p["w1"].dtype
    in_pad = p["w1"].shape[0]
    na_pad = p["wa"].shape[0]
    if state.shape[1] != in_pad:
        state = jnp.pad(state, ((0, 0), (0, in_pad - state.shape[1])))
    if action.shape[1] != na_pad:
        action = jnp.pad(action, ((0, 0), (0, na_pad - action.shape[1])))
    b1, g1, be1 = p["p1"][0:1], p["p1"][1:2], p["p1"][2:3]
    b2, g2, be2 = p["p2"][0:1], p["p2"][1:2], p["p2"][2:3]
    ba, wq, bq = p["p2"][3:4], p["p2"][4:5], p["p2"][5:6, 0:1]

    sv = jnp.dot(state.astype(cdt), p["w1"],
                 preferred_element_type=jnp.float32) + b1
    sv = _layernorm(sv, g1, be1)
    sv = jnp.maximum(sv, 0.0)
    sv = jnp.dot(sv.astype(cdt), p["w2"],
                 preferred_element_type=jnp.float32) + b2
    sv = _layernorm(sv, g2, be2)
    av = jnp.maximum(jnp.dot(action.astype(cdt), p["wa"],
                             preferred_element_type=jnp.float32) + ba, 0.0)
    sav = jnp.maximum(sv + av, 0.0)
    return jnp.sum(sav * wq, axis=-1, keepdims=True) + bq


if __name__ == "__main__":
    # Small but non-trivial shapes: lane-dense hidden dims, 8-aligned inputs
    # (so no hot-path padding), batch large enough for 2 grid steps.
    B, INPUT_DIM, FC1, FC2, N_ACTIONS = 256, 16, 128, 128, 8

    key = jax.random.PRNGKey(0)
    k_state, k_action, k_params = jax.random.split(key, 3)

    state = jax.random.normal(k_state, (B, INPUT_DIM), jnp.float32)
    action = jax.random.normal(k_action, (B, N_ACTIONS), jnp.float32)
    params = init_params(k_params, INPUT_DIM, FC1, FC2, N_ACTIONS)

    out = jax.block_until_ready(critic_forward(state, action, params))
    ref = critic_ref(state, action, params)

    assert out.shape == (B, 1)
    err = float(jnp.max(jnp.abs(out - ref)))
    assert jnp.allclose(out, ref, atol=2e-3, rtol=2e-3), err
    print("KERNEL_OK")
</pallas_src>

<mosaic_0001>
module attributes {stable_mosaic.version = 11 : i64} {
  func.func @critic_kernel(%arg0: i32, %arg1: memref<128x16xf32, #tpu.memory_space<vmem>>, %arg2: memref<128x8xf32, #tpu.memory_space<vmem>>, %arg3: memref<16x128xbf16, #tpu.memory_space<vmem>>, %arg4: memref<128x128xbf16, #tpu.memory_space<vmem>>, %arg5: memref<8x128xbf16, #tpu.memory_space<vmem>>, %arg6: memref<8x128xf32, #tpu.memory_space<vmem>>, %arg7: memref<8x128xf32, #tpu.memory_space<vmem>>, %arg8: memref<1x128xf32, #tpu.memory_space<vmem>>) attributes {dimension_semantics = [#tpu.dimension_semantics<parallel>], iteration_bounds = array<i64: 2>, scalar_prefetch = 0 : i64, scratch_operands = 0 : i64, tpu.core_type = #tpu.core_type<tc>, window_params = [{transform_indices = @transform_0, window_bounds = array<i64: 128, 16>}, {transform_indices = @transform_1, window_bounds = array<i64: 128, 8>}, {pipeline_mode = #tpu.pipeline_mode<synchronous>, transform_indices = @transform_2, window_bounds = array<i64: 16, 128>}, {pipeline_mode = #tpu.pipeline_mode<synchronous>, transform_indices = @transform_3, window_bounds = array<i64: 128, 128>}, {pipeline_mode = #tpu.pipeline_mode<synchronous>, transform_indices = @transform_4, window_bounds = array<i64: 8, 128>}, {pipeline_mode = #tpu.pipeline_mode<synchronous>, transform_indices = @transform_5, window_bounds = array<i64: 8, 128>}, {pipeline_mode = #tpu.pipeline_mode<synchronous>, transform_indices = @transform_6, window_bounds = array<i64: 8, 128>}, {transform_indices = @transform_7, window_bounds = array<i64: 1, 128>}]} {
    %c0 = arith.constant 0 : index
    %c0_0 = arith.constant 0 : index
    %0 = vector.load %arg1[%c0, %c0_0] : memref<128x16xf32, #tpu.memory_space<vmem>>, vector<128x16xf32>
    %1 = arith.truncf %0 : vector<128x16xf32> to vector<128x16xbf16>
    %c0_1 = arith.constant 0 : index
    %c0_2 = arith.constant 0 : index
    %2 = vector.load %arg2[%c0_1, %c0_2] : memref<128x8xf32, #tpu.memory_space<vmem>>, vector<128x8xf32>
    %3 = arith.truncf %2 : vector<128x8xf32> to vector<128x8xbf16>
    %c0_3 = arith.constant 0 : index
    %c0_4 = arith.constant 0 : index
    %4 = vector.load %arg6[%c0_3, %c0_4] : memref<8x128xf32, #tpu.memory_space<vmem>>, vector<1x128xf32>
    %c1 = arith.constant 1 : index
    %c0_5 = arith.constant 0 : index
    %5 = vector.load %arg6[%c1, %c0_5] : memref<8x128xf32, #tpu.memory_space<vmem>>, vector<1x128xf32>
    %c2 = arith.constant 2 : index
    %c0_6 = arith.constant 0 : index
    %6 = vector.load %arg6[%c2, %c0_6] : memref<8x128xf32, #tpu.memory_space<vmem>>, vector<1x128xf32>
    %c0_7 = arith.constant 0 : index
    %c0_8 = arith.constant 0 : index
    %7 = vector.load %arg7[%c0_7, %c0_8] : memref<8x128xf32, #tpu.memory_space<vmem>>, vector<1x128xf32>
    %c1_9 = arith.constant 1 : index
    %c0_10 = arith.constant 0 : index
    %8 = vector.load %arg7[%c1_9, %c0_10] : memref<8x128xf32, #tpu.memory_space<vmem>>, vector<1x128xf32>
    %c2_11 = arith.constant 2 : index
    %c0_12 = arith.constant 0 : index
    %9 = vector.load %arg7[%c2_11, %c0_12] : memref<8x128xf32, #tpu.memory_space<vmem>>, vector<1x128xf32>
    %c3 = arith.constant 3 : index
    %c0_13 = arith.constant 0 : index
    %10 = vector.load %arg7[%c3, %c0_13] : memref<8x128xf32, #tpu.memory_space<vmem>>, vector<1x128xf32>
    %c5 = arith.constant 5 : index
    %c0_14 = arith.constant 0 : index
    %11 = vector.load %arg7[%c5, %c0_14] : memref<8x128xf32, #tpu.memory_space<vmem>>, vector<1x1xf32>
    %c0_15 = arith.constant 0 : index
    %c0_16 = arith.constant 0 : index
    %12 = vector.load %arg3[%c0_15, %c0_16] : memref<16x128xbf16, #tpu.memory_space<vmem>>, vector<16x128xbf16>
    %cst = arith.constant dense<0.000000e+00> : vector<128x128xf32>
    %13 = tpu.matmul %1, %12, %cst {dimension_numbers = #tpu.dot_dimension_numbers<[1], [0], [0], [1], [0, 0, 1, 1], [], []>} : vector<128x16xbf16>, vector<16x128xbf16>, vector<128x128xf32> -> vector<128x128xf32>
    %14 = vector.broadcast %4 : vector<1x128xf32> to vector<128x128xf32>
    %15 = arith.addf %13, %14 : vector<128x128xf32>
    %cst_17 = arith.constant dense<0.000000e+00> : vector<128xf32>
    %16 = vector.multi_reduction <add>, %15, %cst_17 [1] : vector<128x128xf32> to vector<128xf32>
    %17 = vector.shape_cast %16 : vector<128xf32> to vector<128x1xf32>
    %cst_18 = arith.constant 1.280000e+02 : f32
    %18 = vector.broadcast %cst_18 : f32 to vector<128x1xf32>
    %19 = arith.divf %17, %18 : vector<128x1xf32>
    %20 = vector.broadcast %19 : vector<128x1xf32> to vector<128x128xf32>
    %21 = arith.subf %15, %20 : vector<128x128xf32>
    %22 = arith.mulf %21, %21 : vector<128x128xf32>
    %cst_19 = arith.constant dense<0.000000e+00> : vector<128xf32>
    %23 = vector.multi_reduction <add>, %22, %cst_19 [1] : vector<128x128xf32> to vector<128xf32>
    %24 = vector.shape_cast %23 : vector<128xf32> to vector<128x1xf32>
    %cst_20 = arith.constant 1.280000e+02 : f32
    %25 = vector.broadcast %cst_20 : f32 to vector<128x1xf32>
    %26 = arith.divf %24, %25 : vector<128x1xf32>
    %cst_21 = arith.constant 9.99999974E-6 : f32
    %27 = vector.broadcast %cst_21 : f32 to vector<128x1xf32>
    %28 = arith.addf %26, %27 : vector<128x1xf32>
    %29 = math.rsqrt %28 : vector<128x1xf32>
    %30 = vector.broadcast %29 : vector<128x1xf32> to vector<128x128xf32>
    %31 = arith.mulf %21, %30 : vector<128x128xf32>
    %32 = vector.broadcast %5 : vector<1x128xf32> to vector<128x128xf32>
    %33 = arith.mulf %31, %32 : vector<128x128xf32>
    %34 = vector.broadcast %6 : vector<1x128xf32> to vector<128x128xf32>
    %35 = arith.addf %33, %34 : vector<128x128xf32>
    %cst_22 = arith.constant 0.000000e+00 : f32
    %36 = vector.broadcast %cst_22 : f32 to vector<128x128xf32>
    %37 = arith.maximumf %35, %36 : vector<128x128xf32>
    %38 = arith.truncf %37 : vector<128x128xf32> to vector<128x128xbf16>
    %c0_23 = arith.constant 0 : index
    %c0_24 = arith.constant 0 : index
    %39 = vector.load %arg4[%c0_23, %c0_24] : memref<128x128xbf16, #tpu.memory_space<vmem>>, vector<128x128xbf16>
    %cst_25 = arith.constant dense<0.000000e+00> : vector<128x128xf32>
    %40 = tpu.matmul %38, %39, %cst_25 {dimension_numbers = #tpu.dot_dimension_numbers<[1], [0], [0], [1], [0, 0, 1, 1], [], []>} : vector<128x128xbf16>, vector<128x128xbf16>, vector<128x128xf32> -> vector<128x128xf32>
    %41 = vector.broadcast %7 : vector<1x128xf32> to vector<128x128xf32>
    %42 = arith.addf %40, %41 : vector<128x128xf32>
    %cst_26 = arith.constant dense<0.000000e+00> : vector<128xf32>
    %43 = vector.multi_reduction <add>, %42, %cst_26 [1] : vector<128x128xf32> to vector<128xf32>
    %44 = vector.shape_cast %43 : vector<128xf32> to vector<128x1xf32>
    %cst_27 = arith.constant 1.280000e+02 : f32
    %45 = vector.broadcast %cst_27 : f32 to vector<128x1xf32>
    %46 = arith.divf %44, %45 : vector<128x1xf32>
    %47 = vector.broadcast %46 : vector<128x1xf32> to vector<128x128xf32>
    %48 = arith.subf %42, %47 : vector<128x128xf32>
    %49 = arith.mulf %48, %48 : vector<128x128xf32>
    %cst_28 = arith.constant dense<0.000000e+00> : vector<128xf32>
    %50 = vector.multi_reduction <add>, %49, %cst_28 [1] : vector<128x128xf32> to vector<128xf32>
    %51 = vector.shape_cast %50 : vector<128xf32> to vector<128x1xf32>
    %cst_29 = arith.constant 1.280000e+02 : f32
    %52 = vector.broadcast %cst_29 : f32 to vector<128x1xf32>
    %53 = arith.divf %51, %52 : vector<128x1xf32>
    %cst_30 = arith.constant 9.99999974E-6 : f32
    %54 = vector.broadcast %cst_30 : f32 to vector<128x1xf32>
    %55 = arith.addf %53, %54 : vector<128x1xf32>
    %56 = math.rsqrt %55 : vector<128x1xf32>
    %57 = vector.broadcast %56 : vector<128x1xf32> to vector<128x128xf32>
    %58 = arith.mulf %48, %57 : vector<128x128xf32>
    %59 = vector.broadcast %8 : vector<1x128xf32> to vector<128x128xf32>
    %60 = arith.mulf %58, %59 : vector<128x128xf32>
    %61 = vector.broadcast %9 : vector<1x128xf32> to vector<128x128xf32>
    %62 = arith.addf %60, %61 : vector<128x128xf32>
    %c0_31 = arith.constant 0 : index
    %c0_32 = arith.constant 0 : index
    %63 = vector.load %arg5[%c0_31, %c0_32] : memref<8x128xbf16, #tpu.memory_space<vmem>>, vector<8x128xbf16>
    %cst_33 = arith.constant dense<0.000000e+00> : vector<128x128xf32>
    %64 = tpu.matmul %3, %63, %cst_33 {dimension_numbers = #tpu.dot_dimension_numbers<[1], [0], [0], [1], [0, 0, 1, 1], [], []>} : vector<128x8xbf16>, vector<8x128xbf16>, vector<128x128xf32> -> vector<128x128xf32>
    %65 = vector.broadcast %10 : vector<1x128xf32> to vector<128x128xf32>
    %66 = arith.addf %64, %65 : vector<128x128xf32>
    %cst_34 = arith.constant 0.000000e+00 : f32
    %67 = vector.broadcast %cst_34 : f32 to vector<128x128xf32>
    %68 = arith.maximumf %66, %67 : vector<128x128xf32>
    %69 = arith.addf %62, %68 : vector<128x128xf32>
    %cst_35 = arith.constant 0.000000e+00 : f32
    %70 = vector.broadcast %cst_35 : f32 to vector<128x128xf32>
    %71 = arith.maximumf %69, %70 : vector<128x128xf32>
    %c0_36 = arith.constant 0 : index
    %c0_37 = arith.constant 0 : index
    %72 = vector.load %arg7[%c0_36, %c0_37] : memref<8x128xf32, #tpu.memory_space<vmem>>, vector<8x128xf32>
    %cst_38 = arith.constant dense<0.000000e+00> : vector<8x128xf32>
    %73 = tpu.matmul %72, %71, %cst_38 {dimension_numbers = #tpu.dot_dimension_numbers<[1], [1], [0], [0], [0, 0, 1, 0], [], []>} : vector<8x128xf32>, vector<128x128xf32>, vector<8x128xf32> -> vector<8x128xf32>
    %74 = vector.extract_strided_slice %73 {offsets = [4, 0], sizes = [1, 128], strides = [1, 1]} : vector<8x128xf32> to vector<1x128xf32>
    %75 = vector.broadcast %11 : vector<1x1xf32> to vector<1x128xf32>
    %76 = arith.addf %74, %75 : vector<1x128xf32>
    %c0_39 = arith.constant 0 : index
    %c0_40 = arith.constant 0 : index
    %77 = vector.load %arg8[%c0_39, %c0_40] : memref<1x128xf32, #tpu.memory_space<vmem>>, vector<1x128xf32>
    tpu.vector_store %arg8[%c0_39, %c0_40], %76 {strides = array<i32>} : memref<1x128xf32, #tpu.memory_space<vmem>>, vector<1x128xf32>,
    return
  }
  func.func @transform_0(%arg0: i32) -> (i32, i32) {
    %c0_i32 = arith.constant 0 : i32
    %c0_i32_0 = arith.constant 0 : i32
    return %arg0, %c0_i32 : i32, i32
  }
  func.func @transform_1(%arg0: i32) -> (i32, i32) {
    %c0_i32 = arith.constant 0 : i32
    %c0_i32_0 = arith.constant 0 : i32
    return %arg0, %c0_i32 : i32, i32
  }
  func.func @transform_2(%arg0: i32) -> (i32, i32) {
    %c0_i32 = arith.constant 0 : i32
    %c0_i32_0 = arith.constant 0 : i32
    %c0_i32_1 = arith.constant 0 : i32
    return %c0_i32, %c0_i32_0 : i32, i32
  }
  func.func @transform_3(%arg0: i32) -> (i32, i32) {
    %c0_i32 = arith.constant 0 : i32
    %c0_i32_0 = arith.constant 0 : i32
    %c0_i32_1 = arith.constant 0 : i32
    return %c0_i32, %c0_i32_0 : i32, i32
  }
  func.func @transform_4(%arg0: i32) -> (i32, i32) {
    %c0_i32 = arith.constant 0 : i32
    %c0_i32_0 = arith.constant 0 : i32
    %c0_i32_1 = arith.constant 0 : i32
    return %c0_i32, %c0_i32_0 : i32, i32
  }
  func.func @transform_5(%arg0: i32) -> (i32, i32) {
    %c0_i32 = arith.constant 0 : i32
    %c0_i32_0 = arith.constant 0 : i32
    %c0_i32_1 = arith.constant 0 : i32
    return %c0_i32, %c0_i32_0 : i32, i32
  }
  func.func @transform_6(%arg0: i32) -> (i32, i32) {
    %c0_i32 = arith.constant 0 : i32
    %c0_i32_0 = arith.constant 0 : i32
    %c0_i32_1 = arith.constant 0 : i32
    return %c0_i32, %c0_i32_0 : i32, i32
  }
  func.func @transform_7(%arg0: i32) -> (i32, i32) {
    %c0_i32 = arith.constant 0 : i32
    %c0_i32_0 = arith.constant 0 : i32
    return %c0_i32, %arg0 : i32, i32
  }
}

</mosaic_0001>

<llo_original>
// kernel: tpu_custom_call.1
$region0: #{tpu_custom_call.1}
  #allocation0 [shape = 'u32[]', space=smem, size = 0x4, offset = 0x4, fixed_abs, tag = 'smem constant byte address 0x4 - core index']
  #allocation1 [shape = 'u32[144,128]{1,0:T(1,128)}', space=vmem, size = 0x12000, scoped, tag = 'internal scratch']
  %s0 = inlined_call_operand.vmem [shape: f32[256,16], index: 0, kind: input, shape index: {}]
  %s1 = inlined_call_operand.vmem [shape: f32[256,8], index: 1, kind: input, shape index: {}]
  %s2 = inlined_call_operand.vmem [shape: bf16[16,128], index: 2, kind: input, shape index: {}]
  %s3 = inlined_call_operand.vmem [shape: bf16[128,128], index: 3, kind: input, shape index: {}]
  %s4 = inlined_call_operand.vmem [shape: bf16[8,128], index: 4, kind: input, shape index: {}]
  %s5 = inlined_call_operand.vmem [shape: f32[8,128], index: 5, kind: input, shape index: {}]
  %s6 = inlined_call_operand.vmem [shape: f32[8,128], index: 6, kind: input, shape index: {}]
  %s7 = inlined_call_operand.hbm [shape: f32[1,256], index: 7, kind: output, shape index: {}]
  %s8 = sld [smem:[#allocation0]]
  $region61: #{tpu_custom_call.1} parent=0
    _
  %s10 = ssub.s32 1, %s8
  %s11 = scalar_select 0, %s10, %s8
  $region1: #{tpu_custom_call.1} parent=0
    #allocation2 [shape = 'u8[1024]{0}', space=vmem, size = 0x400, scoped, tag = 'output window, operand 0']
    #allocation3 [shape = 's32[2]{0}', space=sflag, size = 0x8, scoped, tag = 'scoped memory for tpu_custom_call.1']
    %12 = vsyncpa [#allocation3], 0
    %s13 = scalar_lea.sflag [#allocation3], 1
    %14 = vsyncpa %s13, 0
    loop: start=0, step=1, limit=4
    $region2: #{tpu_custom_call.1} parent=1 // loop_pre_header
      _
    $region3: #{tpu_custom_call.1} parent=1 // loop_header
      %s16 = sphi 0, %s20
      %p17 = scmp.ge.s32.totalorder %s16, 4
      %s26 = sphi 0, %s28
      %s29 = sphi 0, %s26
      %s30 = sphi 0, %s29
      %s46 = sphi 0, %s30
      %s52 = sphi 0, %s54
      %s55 = sphi 0, %s52
      %s56 = sphi 0, %s55
      %s72 = sphi 0, %s56
      %s76 = sphi 0, %s76
      %s78 = sphi 0, %s76
      %s79 = sphi 0, %s78
      %s93 = sphi 0, %s79
      %s97 = sphi 0, %s97
      %s99 = sphi 0, %s97
      %s100 = sphi 0, %s99
      %s114 = sphi 0, %s100
      %s118 = sphi 0, %s118
      %s120 = sphi 0, %s118
      %s121 = sphi 0, %s120
      %s135 = sphi 0, %s121
      %s139 = sphi 0, %s139
      %s141 = sphi 0, %s139
      %s142 = sphi 0, %s141
      %s156 = sphi 0, %s142
      %s160 = sphi 0, %s160
      %s162 = sphi 0, %s160
      %s163 = sphi 0, %s162
      %s177 = sphi 0, %s163
      %s183 = sphi 0, %s185
      %s186 = sphi 0, %s183
      %s187 = sphi 0, %s186
      %s203 = sphi 0, %s187
    $region4: #{tpu_custom_call.1} parent=1 // loop_header_branch
      %19 = sbr.rel (%p17) target = $region8
    $region5: #{tpu_custom_call.1} parent=1 // loop_body
      %s21 = ssub.s32 %s16, 1
      %s22 = ssub.s32 %s16, 2
      %s23 = sadd.s32 %s16, 1
      %s24 = ssub.s32 %s16, %s23
      %p25 = scmp.eq.s32.totalorder %s24, 0
      %s27 = sadd.s32 %s26, 1
      %s28 = scalar_select %p25, %s26, %s27
      %p31 = pneg %p25
      %p32 = scmp.eq.s32.totalorder %s16, 1
      %p33 = por %p31, %p32
      %p34 = scmp.ne.s32.totalorder %s26, %s29
      %p35 = scmp.eq.s32.totalorder %s16, 0
      %p36 = por %p34, %p35
      %p37 = scmp.ne.s32.totalorder %s26, %s29
      %p38 = scmp.eq.s32.totalorder %s21, 1
      %p39 = por %p37, %p38
      %p40 = scmp.ne.s32.totalorder %s29, %s30
      %p41 = scmp.eq.s32.totalorder %s21, 0
      %p42 = por %p40, %p41
      %p43 = scmp.ne.s32.totalorder %s29, %s30
      %p44 = scmp.eq.s32.totalorder %s22, 1
      %p45 = por %p43, %p44
      %p47 = scmp.ne.s32.totalorder %s30, %s46
      %p48 = scmp.eq.s32.totalorder %s22, 0
      %p49 = por %p47, %p48
      %s50 = ssub.s32 %s16, %s23
      %p51 = scmp.eq.s32.totalorder %s50, 0
      %s53 = sadd.s32 %s52, 1
      %s54 = scalar_select %p51, %s52, %s53
      %p57 = pneg %p51
      %p58 = scmp.eq.s32.totalorder %s16, 1
      %p59 = por %p57, %p58
      %p60 = scmp.ne.s32.totalorder %s52, %s55
      %p61 = scmp.eq.s32.totalorder %s16, 0
      %p62 = por %p60, %p61
      %p63 = scmp.ne.s32.totalorder %s52, %s55
      %p64 = scmp.eq.s32.totalorder %s21, 1
      %p65 = por %p63, %p64
      %p66 = scmp.ne.s32.totalorder %s55, %s56
      %p67 = scmp.eq.s32.totalorder %s21, 0
      %p68 = por %p66, %p67
      %p69 = scmp.ne.s32.totalorder %s55, %s56
      %p70 = scmp.eq.s32.totalorder %s22, 1
      %p71 = por %p69, %p70
      %p73 = scmp.ne.s32.totalorder %s56, %s72
      %p74 = scmp.eq.s32.totalorder %s22, 0
      %p75 = por %p73, %p74
      %s77 = sadd.s32 %s76, 1
      %p80 = scmp.eq.s32.totalorder %s16, 1
      %p81 = scmp.ne.s32.totalorder %s76, %s78
      %p82 = scmp.eq.s32.totalorder %s16, 0
      %p83 = por %p81, %p82
      %p84 = scmp.ne.s32.totalorder %s76, %s78
      %p85 = scmp.eq.s32.totalorder %s21, 1
      %p86 = por %p84, %p85
      %p87 = scmp.ne.s32.totalorder %s78, %s79
      %p88 = scmp.eq.s32.totalorder %s21, 0
      %p89 = por %p87, %p88
      %p90 = scmp.ne.s32.totalorder %s78, %s79
      %p91 = scmp.eq.s32.totalorder %s22, 1
      %p92 = por %p90, %p91
      %p94 = scmp.ne.s32.totalorder %s79, %s93
      %p95 = scmp.eq.s32.totalorder %s22, 0
      %p96 = por %p94, %p95
      %s98 = sadd.s32 %s97, 1
      %p101 = scmp.eq.s32.totalorder %s16, 1
      %p102 = scmp.ne.s32.totalorder %s97, %s99
      %p103 = scmp.eq.s32.totalorder %s16, 0
      %p104 = por %p102, %p103
      %p105 = scmp.ne.s32.totalorder %s97, %s99
      %p106 = scmp.eq.s32.totalorder %s21, 1
      %p107 = por %p105, %p106
      %p108 = scmp.ne.s32.totalorder %s99, %s100
      %p109 = scmp.eq.s32.totalorder %s21, 0
      %p110 = por %p108, %p109
      %p111 = scmp.ne.s32.totalorder %s99, %s100
      %p112 = scmp.eq.s32.totalorder %s22, 1
      %p113 = por %p111, %p112
      %p115 = scmp.ne.s32.totalorder %s100, %s114
      %p116 = scmp.eq.s32.totalorder %s22, 0
      %p117 = por %p115, %p116
      %s119 = sadd.s32 %s118, 1
      %p122 = scmp.eq.s32.totalorder %s16, 1
      %p123 = scmp.ne.s32.totalorder %s118, %s120
      %p124 = scmp.eq.s32.totalorder %s16, 0
      %p125 = por %p123, %p124
      %p126 = scmp.ne.s32.totalorder %s118, %s120
      %p127 = scmp.eq.s32.totalorder %s21, 1
      %p128 = por %p126, %p127
      %p129 = scmp.ne.s32.totalorder %s120, %s121
      %p130 = scmp.eq.s32.totalorder %s21, 0
      %p131 = por %p129, %p130
      %p132 = scmp.ne.s32.totalorder %s120, %s121
      %p133 = scmp.eq.s32.totalorder %s22, 1
      %p134 = por %p132, %p133
      %p136 = scmp.ne.s32.totalorder %s121, %s135
      %p137 = scmp.eq.s32.totalorder %s22, 0
      %p138 = por %p136, %p137
      %s140 = sadd.s32 %s139, 1
      %p143 = scmp.eq.s32.totalorder %s16, 1
      %p144 = scmp.ne.s32.totalorder %s139, %s141
      %p145 = scmp.eq.s32.totalorder %s16, 0
      %p146 = por %p144, %p145
      %p147 = scmp.ne.s32.totalorder %s139, %s141
      %p148 = scmp.eq.s32.totalorder %s21, 1
      %p149 = por %p147, %p148
      %p150 = scmp.ne.s32.totalorder %s141, %s142
      %p151 = scmp.eq.s32.totalorder %s21, 0
      %p152 = por %p150, %p151
      %p153 = scmp.ne.s32.totalorder %s141, %s142
      %p154 = scmp.eq.s32.totalorder %s22, 1
      %p155 = por %p153, %p154
      %p157 = scmp.ne.s32.totalorder %s142, %s156
      %p158 = scmp.eq.s32.totalorder %s22, 0
      %p159 = por %p157, %p158
      %s161 = sadd.s32 %s160, 1
      %p164 = scmp.eq.s32.totalorder %s16, 1
      %p165 = scmp.ne.s32.totalorder %s160, %s162
      %p166 = scmp.eq.s32.totalorder %s16, 0
      %p167 = por %p165, %p166
      %p168 = scmp.ne.s32.totalorder %s160, %s162
      %p169 = scmp.eq.s32.totalorder %s21, 1
      %p170 = por %p168, %p169
      %p171 = scmp.ne.s32.totalorder %s162, %s163
      %p172 = scmp.eq.s32.totalorder %s21, 0
      %p173 = por %p171, %p172
      %p174 = scmp.ne.s32.totalorder %s162, %s163
      %p175 = scmp.eq.s32.totalorder %s22, 1
      %p176 = por %p174, %p175
      %p178 = scmp.ne.s32.totalorder %s163, %s177
      %p179 = scmp.eq.s32.totalorder %s22, 0
      %p180 = por %p178, %p179
      %s181 = ssub.s32 %s16, %s23
      %p182 = scmp.eq.s32.totalorder %s181, 0
      %s184 = sadd.s32 %s183, 1
      %s185 = scalar_select %p182, %s183, %s184
      %p188 = pneg %p182
      %p189 = scmp.eq.s32.totalorder %s16, 1
      %p190 = por %p188, %p189
      %p191 = scmp.ne.s32.totalorder %s183, %s186
      %p192 = scmp.eq.s32.totalorder %s16, 0
      %p193 = por %p191, %p192
      %p194 = scmp.ne.s32.totalorder %s183, %s186
      %p195 = scmp.eq.s32.totalorder %s21, 1
      %p196 = por %p194, %p195
      %p197 = scmp.ne.s32.totalorder %s186, %s187
      %p198 = scmp.eq.s32.totalorder %s21, 0
      %p199 = por %p197, %p198
      %p200 = scmp.ne.s32.totalorder %s186, %s187
      %p201 = scmp.eq.s32.totalorder %s22, 1
      %p202 = por %p200, %p201
      %p204 = scmp.ne.s32.totalorder %s187, %s203
      %p205 = scmp.eq.s32.totalorder %s22, 0
      %p206 = por %p204, %p205
      %p207 = scmp.le.s32.totalorder 1, %s16
      %p208 = scmp.lt.s32.totalorder %s16, 3
      %p209 = pnand %p207, %p208
      %p210 = pneg %p209
      // Predicated region
      $region9: #{tpu_custom_call.1} parent=5 // pred_check
        _
      $region10: #{tpu_custom_call.1} parent=5 // pred_check_branch
        %212 = sbr.rel (%p209) target = $region12
      $region11: #{tpu_custom_call.1} parent=5 // pred_region
        %s213 = ssub.s32 %s16, 1
        // Predicated region
        $region13: #{tpu_custom_call.1} parent=11 // pred_check
          %p214 = pneg %p89
        $region14: #{tpu_custom_call.1} parent=11 // pred_check_branch
          %216 = sbr.rel (%p214) target = $region16
        $region15: #{tpu_custom_call.1} parent=11 // pred_region
          _
        $region16: #{tpu_custom_call.1} parent=11 // pred_fallthru
          _
        // Predicated region
        $region17: #{tpu_custom_call.1} parent=11 // pred_check
          %p217 = pneg %p110
        $region18: #{tpu_custom_call.1} parent=11 // pred_check_branch
          %219 = sbr.rel (%p217) target = $region20
        $region19: #{tpu_custom_call.1} parent=11 // pred_region
          _
        $region20: #{tpu_custom_call.1} parent=11 // pred_fallthru
          _
        // Predicated region
        $region21: #{tpu_custom_call.1} parent=11 // pred_check
          %p220 = pneg %p131
        $region22: #{tpu_custom_call.1} parent=11 // pred_check_branch
          %222 = sbr.rel (%p220) target = $region24
        $region23: #{tpu_custom_call.1} parent=11 // pred_region
          _
        $region24: #{tpu_custom_call.1} parent=11 // pred_fallthru
          _
        // Predicated region
        $region25: #{tpu_custom_call.1} parent=11 // pred_check
          %p223 = pneg %p152
        $region26: #{tpu_custom_call.1} parent=11 // pred_check_branch
          %225 = sbr.rel (%p223) target = $region28
        $region27: #{tpu_custom_call.1} parent=11 // pred_region
          _
        $region28: #{tpu_custom_call.1} parent=11 // pred_fallthru
          _
        // Predicated region
        $region29: #{tpu_custom_call.1} parent=11 // pred_check
          %p226 = pneg %p173
        $region30: #{tpu_custom_call.1} parent=11 // pred_check_branch
          %228 = sbr.rel (%p226) target = $region32
        $region31: #{tpu_custom_call.1} parent=11 // pred_region
          _
        $region32: #{tpu_custom_call.1} parent=11 // pred_fallthru
          _
      $region12: #{tpu_custom_call.1} parent=5 // pred_fallthru
        _
      %p229 = scmp.lt.s32.totalorder %s16, 2
      // Predicated region
      $region33: #{tpu_custom_call.1} parent=5 // pred_check
        %p230 = pneg %p229
      $region34: #{tpu_custom_call.1} parent=5 // pred_check_branch
        %232 = sbr.rel (%p230) target = $region36
      $region35: #{tpu_custom_call.1} parent=5 // pred_region
        // Predicated region
        $region37: #{tpu_custom_call.1} parent=35 // pred_check
          %p233 = pneg %p36
        $region38: #{tpu_custom_call.1} parent=35 // pred_check_branch
          %235 = sbr.rel (%p233) target = $region40
        $region39: #{tpu_custom_call.1} parent=35 // pred_region
          %s236 = smul.u32 16, %s16
          %p237 = scmp.lt.s32.totalorder %s236, 31
          %s238 = scalar_select %p237, %s236, 31
          %s239 = smul.addr %s238, 8
          %s240 = scalar_lea.vmem %s0, %s239
          %s241 = smul.u32 16, %s16
        $region40: #{tpu_custom_call.1} parent=35 // pred_fallthru
          _
        // Predicated region
        $region41: #{tpu_custom_call.1} parent=35 // pred_check
          %p242 = pneg %p62
        $region42: #{tpu_custom_call.1} parent=35 // pred_check_branch
          %244 = sbr.rel (%p242) target = $region44
        $region43: #{tpu_custom_call.1} parent=35 // pred_region
          %s245 = smul.u32 16, %s16
          %p246 = scmp.lt.s32.totalorder %s245, 31
          %s247 = scalar_select %p246, %s245, 31
          %s248 = smul.addr %s247, 8
          %s249 = scalar_lea.vmem %s1, %s248
          %s250 = smul.u32 16, %s16
        $region44: #{tpu_custom_call.1} parent=35 // pred_fallthru
          _
      $region36: #{tpu_custom_call.1} parent=5 // pred_fallthru
        _
      %p251 = scmp.le.s32.totalorder 1, %s16
      %p252 = scmp.lt.s32.totalorder %s16, 3
      %p253 = pnand %p251, %p252
      %p254 = pneg %p253
      // Predicated region
      $region45: #{tpu_custom_call.1} parent=5 // pred_check
        _
      $region46: #{tpu_custom_call.1} parent=5 // pred_check_branch
        %256 = sbr.rel (%p253) target = $region48
      $region47: #{tpu_custom_call.1} parent=5 // pred_region
        %s257 = ssub.s32 %s16, 1
        %s258 = smul.u32 16, %s21
        %p259 = scmp.lt.s32.totalorder %s258, 31
        %s260 = scalar_select %p259, %s258, 31
        %s261 = smul.addr %s260, 8
        %s262 = scalar_lea.vmem %s0, %s261
        %p263 = pneg %p42
        %p264 = pneg %p39
        %s265 = smul.u32 16, %s21
        %p266 = scmp.lt.s32.totalorder %s265, 31
        %s267 = scalar_select %p266, %s265, 31
        %s268 = smul.addr %s267, 8
        %s269 = scalar_lea.vmem %s1, %s268
        %p270 = pneg %p68
        %p271 = pneg %p65
        %p272 = pneg %p89
        %p273 = pneg %p86
        %p274 = pneg %p110
        %p275 = pneg %p107
        %p276 = pneg %p131
        %p277 = pneg %p128
        %p278 = pneg %p152
        %p279 = pneg %p149
        %p280 = pneg %p173
        %p281 = pneg %p170
        %p282 = pneg %p199
        %p283 = pneg %p196
        %s284 = sand.u32 %s186, 1
        %s285 = scalar_lea.sflag [#allocation3], %s284
        %s286 = sand.u32 %s186, 1
        %s287 = scalar_lea.vmem [#allocation2], %s286
        %s288 = smul.u32 16, %s21
        %p289 = scmp.lt.s32.totalorder %s288, 31
        %s290 = scalar_select %p289, %s288, 31
        %s291 = smul.addr %s290, 8
        %s292 = scalar_lea.vmem %s0, %s291
        %s293 = smul.u32 16, %s21
        %s294 = smul.u32 16, %s21
        %p295 = scmp.lt.s32.totalorder %s294, 31
        %s296 = scalar_select %p295, %s294, 31
        %s297 = smul.addr %s296, 8
        %s298 = scalar_lea.vmem %s1, %s297
        %s299 = smul.u32 16, %s21
        %v301 = vld [vmem:[%s292] sm:$0xff]
        %v302 = vld [vmem:[%s292 + $0x8] sm:$0xff]
        %v303 = vld [vmem:[%s292 + $0x10] sm:$0xff]
        %v304 = vld [vmem:[%s292 + $0x18] sm:$0xff]
        %v305 = vld [vmem:[%s292 + $0x20] sm:$0xff]
        %v306 = vld [vmem:[%s292 + $0x28] sm:$0xff]
        %v307 = vld [vmem:[%s292 + $0x30] sm:$0xff]
        %v308 = vld [vmem:[%s292 + $0x38] sm:$0xff]
        %v309 = vld [vmem:[%s292 + $0x40] sm:$0xff]
        %v310 = vld [vmem:[%s292 + $0x48] sm:$0xff]
        %v311 = vld [vmem:[%s292 + $0x50] sm:$0xff]
        %v312 = vld [vmem:[%s292 + $0x58] sm:$0xff]
        %v313 = vld [vmem:[%s292 + $0x60] sm:$0xff]
        %v314 = vld [vmem:[%s292 + $0x68] sm:$0xff]
        %v315 = vld [vmem:[%s292 + $0x70] sm:$0xff]
        %v316 = vld [vmem:[%s292 + $0x78] sm:$0xff]
        %v317 = vpack.c.bf16 %v302, %v301
        %v318 = vpack.c.bf16 %v304, %v303
        %v319 = vpack.c.bf16 %v306, %v305
        %v320 = vpack.c.bf16 %v308, %v307
        %v321 = vpack.c.bf16 %v310, %v309
        %v322 = vpack.c.bf16 %v312, %v311
        %v323 = vpack.c.bf16 %v314, %v313
        %v324 = vpack.c.bf16 %v316, %v315
        %v325 = vld [vmem:[%s298] sm:$0xff]
        %v326 = vld [vmem:[%s298 + $0x8] sm:$0xff]
        %v327 = vld [vmem:[%s298 + $0x10] sm:$0xff]
        %v328 = vld [vmem:[%s298 + $0x18] sm:$0xff]
        %v329 = vld [vmem:[%s298 + $0x20] sm:$0xff]
        %v330 = vld [vmem:[%s298 + $0x28] sm:$0xff]
        %v331 = vld [vmem:[%s298 + $0x30] sm:$0xff]
        %v332 = vld [vmem:[%s298 + $0x38] sm:$0xff]
        %v333 = vld [vmem:[%s298 + $0x40] sm:$0xff]
        %v334 = vld [vmem:[%s298 + $0x48] sm:$0xff]
        %v335 = vld [vmem:[%s298 + $0x50] sm:$0xff]
        %v336 = vld [vmem:[%s298 + $0x58] sm:$0xff]
        %v337 = vld [vmem:[%s298 + $0x60] sm:$0xff]
        %v338 = vld [vmem:[%s298 + $0x68] sm:$0xff]
        %v339 = vld [vmem:[%s298 + $0x70] sm:$0xff]
        %v340 = vld [vmem:[%s298 + $0x78] sm:$0xff]
        %v341 = vpack.c.bf16 %v326, %v325
        %v342 = vpack.c.bf16 %v328, %v327
        %v343 = vpack.c.bf16 %v330, %v329
        %v344 = vpack.c.bf16 %v332, %v331
        %v345 = vpack.c.bf16 %v334, %v333
        %v346 = vpack.c.bf16 %v336, %v335
        %v347 = vpack.c.bf16 %v338, %v337
        %v348 = vpack.c.bf16 %v340, %v339
        %v349 = vld [vmem:[%s5] sm:$0x1]
        %v350 = vld [vmem:[%s5 + $0x1] sm:$0x1]
        %v351 = vld [vmem:[%s5 + $0x2] sm:$0x1]
        %v352 = vld [vmem:[%s6] sm:$0x1]
        %v353 = vld [vmem:[%s6 + $0x1] sm:$0x1]
        %v354 = vld [vmem:[%s6 + $0x2] sm:$0x1]
        %v355 = vld [vmem:[%s6 + $0x3] sm:$0x1]
        %v356 = vld [vmem:[%s6 + $0x5] sm:$0x1]
        %v357 = vld [vmem:[%s2] sm:$0xf]
        %v358 = vld [vmem:[%s2 + $0x4] sm:$0xf]
        %v359 = vlaneseq
        %v360 = vshrl.u32 %v359, 7
        %v361 = vsub.s32 0, %v360
        %v362 = vrot.slane %v349, %v361
        %v365 = vunpack.c.l.b16 %v357
        %v366 = vunpack.c.l.b16 %v358
        %v367 = vpack.c.b16 %v366, %v365
        %vm369 = vcmask 130048
        %v371 = vsel %vm369, %v317, 0
        %v374 = vsel %vm369, %v318, 0
        %v377 = vsel %vm369, %v319, 0
        %v380 = vsel %vm369, %v320, 0
        %v383 = vsel %vm369, %v321, 0
        %v386 = vsel %vm369, %v322, 0
        %v389 = vsel %vm369, %v323, 0
        %v392 = vsel %vm369, %v324, 0
        %394 = vmatprep.subr.bf16.mxu0 0
        %395 = vmatpush1.bf16.msra.mxu0 %v367
        %396 = vmatprep.subr.bf16.mxu0 0
        %397 = vmatpush1.bf16.msra.mxu0 0
        %398 = vmatprep.subr.bf16.mxu0 0
        %399 = vmatpush1.bf16.msra.mxu0 0
        %400 = vmatprep.subr.bf16.mxu0 0
        %401 = vmatpush1.bf16.msra.mxu0 0
        %402 = vmatprep.subr.bf16.mxu0 0
        %403 = vmatpush1.bf16.msra.mxu0 0
        %404 = vmatprep.subr.bf16.mxu0 0
        %405 = vmatpush1.bf16.msra.mxu0 0
        %406 = vmatprep.subr.bf16.mxu0 0
        %407 = vmatpush1.bf16.msra.mxu0 0
        %408 = vmatprep.subr.bf16.mxu0 0
        %409 = vmatpush1.bf16.msra.mxu0 0
        %410 = vmatprep.subr.bf16.mxu0 0
        %411 = vmatpush1.bf16.msra.mxu0 0
        %412 = vmatprep.subr.bf16.mxu0 0
        %413 = vmatpush1.bf16.msra.mxu0 0
        %414 = vmatprep.subr.bf16.mxu0 0
        %415 = vmatpush1.bf16.msra.mxu0 0
        %416 = vmatprep.subr.bf16.mxu0 0
        %417 = vmatpush1.bf16.msra.mxu0 0
        %418 = vmatprep.subr.bf16.mxu0 0
        %419 = vmatpush1.bf16.msra.mxu0 0
        %420 = vmatprep.subr.bf16.mxu0 0
        %421 = vmatpush1.bf16.msra.mxu0 0
        %422 = vmatprep.subr.bf16.mxu0 0
        %423 = vmatpush1.bf16.msra.mxu0 0
        %424 = vmatprep.subr.bf16.mxu0 0
        %425 = vmatpush1.bf16.msra.mxu0 0
        %426 = vmatprep.mubr.bf16.mxu0 0
        %427 = vmatmul.mubr.bf16.gmra.mrb[0].mxu0 %v371
        %v428 = vpop.f32.mrb[0].mxu0
        %v429 = vadd.f32 %v362, %v428
        %v430 = vpop.f32.mrb[0].mxu0
        %v431 = vpop.f32.mrb[0].mxu0
        %v432 = vadd.f32 %v362, %v431
        %v433 = vpop.f32.mrb[0].mxu0
        %434 = vmatprep.mubr.bf16.mxu0 0
        %435 = vmatmul.mubr.bf16.gmra.mrb[0].mxu0 %v374
        %v436 = vpop.f32.mrb[0].mxu0
        %v437 = vadd.f32 %v362, %v436
        %v438 = vpop.f32.mrb[0].mxu0
        %v439 = vpop.f32.mrb[0].mxu0
        %v440 = vadd.f32 %v362, %v439
        %v441 = vpop.f32.mrb[0].mxu0
        %442 = vmatprep.mubr.bf16.mxu0 0
        %443 = vmatmul.mubr.bf16.gmra.mrb[0].mxu0 %v377
        %v444 = vpop.f32.mrb[0].mxu0
        %v445 = vadd.f32 %v362, %v444
        %v446 = vpop.f32.mrb[0].mxu0
        %v447 = vpop.f32.mrb[0].mxu0
        %v448 = vadd.f32 %v362, %v447
        %v449 = vpop.f32.mrb[0].mxu0
        %450 = vmatprep.mubr.bf16.mxu0 0
        %451 = vmatmul.mubr.bf16.gmra.mrb[0].mxu0 %v380
        %v452 = vpop.f32.mrb[0].mxu0
        %v453 = vadd.f32 %v362, %v452
        %v454 = vpop.f32.mrb[0].mxu0
        %v455 = vpop.f32.mrb[0].mxu0
        %v456 = vadd.f32 %v362, %v455
        %v457 = vpop.f32.mrb[0].mxu0
        %458 = vmatprep.mubr.bf16.mxu0 0
        %459 = vmatmul.mubr.bf16.gmra.mrb[0].mxu0 %v383
        %v460 = vpop.f32.mrb[0].mxu0
        %v461 = vadd.f32 %v362, %v460
        %v462 = vpop.f32.mrb[0].mxu0
        %v463 = vpop.f32.mrb[0].mxu0
        %v464 = vadd.f32 %v362, %v463
        %v465 = vpop.f32.mrb[0].mxu0
        %466 = vmatprep.mubr.bf16.mxu0 0
        %467 = vmatmul.mubr.bf16.gmra.mrb[0].mxu0 %v386
        %v468 = vpop.f32.mrb[0].mxu0
        %v469 = vadd.f32 %v362, %v468
        %v470 = vpop.f32.mrb[0].mxu0
        %v471 = vpop.f32.mrb[0].mxu0
        %v472 = vadd.f32 %v362, %v471
        %v473 = vpop.f32.mrb[0].mxu0
        %474 = vmatprep.mubr.bf16.mxu0 0
        %475 = vmatmul.mubr.bf16.gmra.mrb[0].mxu0 %v389
        %v476 = vpop.f32.mrb[0].mxu0
        %v477 = vadd.f32 %v362, %v476
        %v478 = vpop.f32.mrb[0].mxu0
        %v479 = vpop.f32.mrb[0].mxu0
        %v480 = vadd.f32 %v362, %v479
        %v481 = vpop.f32.mrb[0].mxu0
        %482 = vmatprep.mubr.bf16.mxu0 0
        %483 = vmatmul.mubr.bf16.gmra.mrb[0].mxu0 %v392
        %v484 = vpop.f32.mrb[0].mxu0
        %v485 = vadd.f32 %v362, %v484
        %v486 = vpop.f32.mrb[0].mxu0
        %v487 = vpop.f32.mrb[0].mxu0
        %v488 = vadd.f32 %v362, %v487
        %v489 = vpop.f32.mrb[0].mxu0
        %490 = vdwg.mxu0
        %491 = vadd.xlane.f32.xlu0 %v429
        %v492 = vpop.xlane.xlu0 %491
        %493 = vadd.xlane.f32.xlu0 %v432
        %v494 = vpop.xlane.xlu0 %493
        %495 = vadd.xlane.f32.xlu0 %v437
        %v496 = vpop.xlane.xlu0 %495
        %497 = vadd.xlane.f32.xlu0 %v440
        %v498 = vpop.xlane.xlu0 %497
        %499 = vadd.xlane.f32.xlu0 %v445
        %v500 = vpop.xlane.xlu0 %499
        %501 = vadd.xlane.f32.xlu0 %v448
        %v502 = vpop.xlane.xlu0 %501
        %503 = vadd.xlane.f32.xlu0 %v453
        %v504 = vpop.xlane.xlu0 %503
        %505 = vadd.xlane.f32.xlu0 %v456
        %v506 = vpop.xlane.xlu0 %505
        %507 = vadd.xlane.f32.xlu0 %v461
        %v508 = vpop.xlane.xlu0 %507
        %509 = vadd.xlane.f32.xlu0 %v464
        %v510 = vpop.xlane.xlu0 %509
        %511 = vadd.xlane.f32.xlu0 %v469
        %v512 = vpop.xlane.xlu0 %511
        %513 = vadd.xlane.f32.xlu0 %v472
        %v514 = vpop.xlane.xlu0 %513
        %515 = vadd.xlane.f32.xlu0 %v477
        %v516 = vpop.xlane.xlu0 %515
        %517 = vadd.xlane.f32.xlu0 %v480
        %v518 = vpop.xlane.xlu0 %517
        %519 = vadd.xlane.f32.xlu0 %v485
        %v520 = vpop.xlane.xlu0 %519
        %521 = vadd.xlane.f32.xlu0 %v488
        %v522 = vpop.xlane.xlu0 %521
        %v523 = vrcp.pop 128.0
        %v524 = vmul.f32 %v492, %v523
        %v525 = vmul.f32 %v494, %v523
        %v526 = vmul.f32 %v496, %v523
        %v527 = vmul.f32 %v498, %v523
        %v528 = vmul.f32 %v500, %v523
        %v529 = vmul.f32 %v502, %v523
        %v530 = vmul.f32 %v504, %v523
        %v531 = vmul.f32 %v506, %v523
        %v532 = vmul.f32 %v508, %v523
        %v533 = vmul.f32 %v510, %v523
        %v534 = vmul.f32 %v512, %v523
        %v535 = vmul.f32 %v514, %v523
        %v536 = vmul.f32 %v516, %v523
        %v537 = vmul.f32 %v518, %v523
        %v538 = vmul.f32 %v520, %v523
        %v539 = vmul.f32 %v522, %v523
        %v540 = vsub.f32 %v429, %v524
        %v541 = vsub.f32 %v432, %v525
        %v542 = vsub.f32 %v437, %v526
        %v543 = vsub.f32 %v440, %v527
        %v544 = vsub.f32 %v445, %v528
        %v545 = vsub.f32 %v448, %v529
        %v546 = vsub.f32 %v453, %v530
        %v547 = vsub.f32 %v456, %v531
        %v548 = vsub.f32 %v461, %v532
        %v549 = vsub.f32 %v464, %v533
        %v550 = vsub.f32 %v469, %v534
        %v551 = vsub.f32 %v472, %v535
        %v552 = vsub.f32 %v477, %v536
        %v553 = vsub.f32 %v480, %v537
        %v554 = vsub.f32 %v485, %v538
        %v555 = vsub.f32 %v488, %v539
        %v556 = vmul.f32 %v540, %v540
        %v557 = vmul.f32 %v541, %v541
        %v558 = vmul.f32 %v542, %v542
        %v559 = vmul.f32 %v543, %v543
        %v560 = vmul.f32 %v544, %v544
        %v561 = vmul.f32 %v545, %v545
        %v562 = vmul.f32 %v546, %v546
        %v563 = vmul.f32 %v547, %v547
        %v564 = vmul.f32 %v548, %v548
        %v565 = vmul.f32 %v549, %v549
        %v566 = vmul.f32 %v550, %v550
        %v567 = vmul.f32 %v551, %v551
        %v568 = vmul.f32 %v552, %v552
        %v569 = vmul.f32 %v553, %v553
        %v570 = vmul.f32 %v554, %v554
        %v571 = vmul.f32 %v555, %v555
        %572 = vadd.xlane.f32.xlu0 %v556
        %v573 = vpop.xlane.xlu0 %572
        %574 = vadd.xlane.f32.xlu0 %v557
        %v575 = vpop.xlane.xlu0 %574
        %576 = vadd.xlane.f32.xlu0 %v558
        %v577 = vpop.xlane.xlu0 %576
        %578 = vadd.xlane.f32.xlu0 %v559
        %v579 = vpop.xlane.xlu0 %578
        %580 = vadd.xlane.f32.xlu0 %v560
        %v581 = vpop.xlane.xlu0 %580
        %582 = vadd.xlane.f32.xlu0 %v561
        %v583 = vpop.xlane.xlu0 %582
        %584 = vadd.xlane.f32.xlu0 %v562
        %v585 = vpop.xlane.xlu0 %584
        %586 = vadd.xlane.f32.xlu0 %v563
        %v587 = vpop.xlane.xlu0 %586
        %588 = vadd.xlane.f32.xlu0 %v564
        %v589 = vpop.xlane.xlu0 %588
        %590 = vadd.xlane.f32.xlu0 %v565
        %v591 = vpop.xlane.xlu0 %590
        %592 = vadd.xlane.f32.xlu0 %v566
        %v593 = vpop.xlane.xlu0 %592
        %594 = vadd.xlane.f32.xlu0 %v567
        %v595 = vpop.xlane.xlu0 %594
        %596 = vadd.xlane.f32.xlu0 %v568
        %v597 = vpop.xlane.xlu0 %596
        %598 = vadd.xlane.f32.xlu0 %v569
        %v599 = vpop.xlane.xlu0 %598
        %600 = vadd.xlane.f32.xlu0 %v570
        %v601 = vpop.xlane.xlu0 %600
        %602 = vadd.xlane.f32.xlu0 %v571
        %v603 = vpop.xlane.xlu0 %602
        %v604 = vmul.f32 %v573, %v523
        %v605 = vmul.f32 %v575, %v523
        %v606 = vmul.f32 %v577, %v523
        %v607 = vmul.f32 %v579, %v523
        %v608 = vmul.f32 %v581, %v523
        %v609 = vmul.f32 %v583, %v523
        %v610 = vmul.f32 %v585, %v523
        %v611 = vmul.f32 %v587, %v523
        %v612 = vmul.f32 %v589, %v523
        %v613 = vmul.f32 %v591, %v523
        %v614 = vmul.f32 %v593, %v523
        %v615 = vmul.f32 %v595, %v523
        %v616 = vmul.f32 %v597, %v523
        %v617 = vmul.f32 %v599, %v523
        %v618 = vmul.f32 %v601, %v523
        %v619 = vmul.f32 %v603, %v523
        %v620 = vadd.f32 %v604, 1e-05
        %v621 = vadd.f32 %v605, 1e-05
        %v622 = vadd.f32 %v606, 1e-05
        %v623 = vadd.f32 %v607, 1e-05
        %v624 = vadd.f32 %v608, 1e-05
        %v625 = vadd.f32 %v609, 1e-05
        %v626 = vadd.f32 %v610, 1e-05
        %v627 = vadd.f32 %v611, 1e-05
        %v628 = vadd.f32 %v612, 1e-05
        %v629 = vadd.f32 %v613, 1e-05
        %v630 = vadd.f32 %v614, 1e-05
        %v631 = vadd.f32 %v615, 1e-05
        %v632 = vadd.f32 %v616, 1e-05
        %v633 = vadd.f32 %v617, 1e-05
        %v634 = vadd.f32 %v618, 1e-05
        %v635 = vadd.f32 %v619, 1e-05
        %v636 = vrsqrt.pop %v620
        %v637 = vrsqrt.pop %v621
        %v638 = vrsqrt.pop %v622
        %v639 = vrsqrt.pop %v623
        %v640 = vrsqrt.pop %v624
        %v641 = vrsqrt.pop %v625
        %v642 = vrsqrt.pop %v626
        %v643 = vrsqrt.pop %v627
        %v644 = vrsqrt.pop %v628
        %v645 = vrsqrt.pop %v629
        %v646 = vrsqrt.pop %v630
        %v647 = vrsqrt.pop %v631
        %v648 = vrsqrt.pop %v632
        %v649 = vrsqrt.pop %v633
        %v650 = vrsqrt.pop %v634
        %v651 = vrsqrt.pop %v635
        %v652 = vmul.f32 %v540, %v636
        %v653 = vmul.f32 %v541, %v637
        %v654 = vmul.f32 %v542, %v638
        %v655 = vmul.f32 %v543, %v639
        %v656 = vmul.f32 %v544, %v640
        %v657 = vmul.f32 %v545, %v641
        %v658 = vmul.f32 %v546, %v642
        %v659 = vmul.f32 %v547, %v643
        %v660 = vmul.f32 %v548, %v644
        %v661 = vmul.f32 %v549, %v645
        %v662 = vmul.f32 %v550, %v646
        %v663 = vmul.f32 %v551, %v647
        %v664 = vmul.f32 %v552, %v648
        %v665 = vmul.f32 %v553, %v649
        %v666 = vmul.f32 %v554, %v650
        %v667 = vmul.f32 %v555, %v651
        %v668 = vlaneseq
        %v669 = vshrl.u32 %v668, 7
        %v670 = vsub.s32 0, %v669
        %v671 = vrot.slane %v350, %v670
        %v672 = vmul.f32 %v652, %v671
        %v673 = vmul.f32 %v653, %v671
        %v674 = vmul.f32 %v654, %v671
        %v675 = vmul.f32 %v655, %v671
        %v676 = vmul.f32 %v656, %v671
        %v677 = vmul.f32 %v657, %v671
        %v678 = vmul.f32 %v658, %v671
        %v679 = vmul.f32 %v659, %v671
        %v680 = vmul.f32 %v660, %v671
        %v681 = vmul.f32 %v661, %v671
        %v682 = vmul.f32 %v662, %v671
        %v683 = vmul.f32 %v663, %v671
        %v684 = vmul.f32 %v664, %v671
        %v685 = vmul.f32 %v665, %v671
        %v686 = vmul.f32 %v666, %v671
        %v687 = vmul.f32 %v667, %v671
        %v688 = vlaneseq
        %v689 = vshrl.u32 %v688, 7
        %v690 = vsub.s32 0, %v689
        %v691 = vrot.slane %v351, %v690
        %v692 = vadd.f32 %v672, %v691
        %v693 = vadd.f32 %v673, %v691
        %v694 = vadd.f32 %v674, %v691
        %v695 = vadd.f32 %v675, %v691
        %v696 = vadd.f32 %v676, %v691
        %v697 = vadd.f32 %v677, %v691
        %v698 = vadd.f32 %v678, %v691
        %v699 = vadd.f32 %v679, %v691
        %v700 = vadd.f32 %v680, %v691
        %v701 = vadd.f32 %v681, %v691
        %v702 = vadd.f32 %v682, %v691
        %v703 = vadd.f32 %v683, %v691
        %v704 = vadd.f32 %v684, %v691
        %v705 = vadd.f32 %v685, %v691
        %v706 = vadd.f32 %v686, %v691
        %v707 = vadd.f32 %v687, %v691
        %v708 = vmax.f32 %v692, 0.0
        %v709 = vmax.f32 %v693, 0.0
        %v710 = vmax.f32 %v694, 0.0
        %v711 = vmax.f32 %v695, 0.0
        %v712 = vmax.f32 %v696, 0.0
        %v713 = vmax.f32 %v697, 0.0
        %v714 = vmax.f32 %v698, 0.0
        %v715 = vmax.f32 %v699, 0.0
        %v716 = vmax.f32 %v700, 0.0
        %v717 = vmax.f32 %v701, 0.0
        %v718 = vmax.f32 %v702, 0.0
        %v719 = vmax.f32 %v703, 0.0
        %v720 = vmax.f32 %v704, 0.0
        %v721 = vmax.f32 %v705, 0.0
        %v722 = vmax.f32 %v706, 0.0
        %v723 = vmax.f32 %v707, 0.0
        %v724 = vpack.c.bf16 %v709, %v708
        %v725 = vpack.c.bf16 %v711, %v710
        %v726 = vpack.c.bf16 %v713, %v712
        %v727 = vpack.c.bf16 %v715, %v714
        %v728 = vpack.c.bf16 %v717, %v716
        %v729 = vpack.c.bf16 %v719, %v718
        %v730 = vpack.c.bf16 %v721, %v720
        %v731 = vpack.c.bf16 %v723, %v722
        %v732 = vld [vmem:[%s3] sm:$0xf]
        %v733 = vld [vmem:[%s3 + $0x4] sm:$0xf]
        %v734 = vld [vmem:[%s3 + $0x8] sm:$0xf]
        %v735 = vld [vmem:[%s3 + $0xc] sm:$0xf]
        %v736 = vld [vmem:[%s3 + $0x10] sm:$0xf]
        %v737 = vld [vmem:[%s3 + $0x14] sm:$0xf]
        %v738 = vld [vmem:[%s3 + $0x18] sm:$0xf]
        %v739 = vld [vmem:[%s3 + $0x1c] sm:$0xf]
        %v740 = vld [vmem:[%s3 + $0x20] sm:$0xf]
        %v741 = vld [vmem:[%s3 + $0x24] sm:$0xf]
        %v742 = vld [vmem:[%s3 + $0x28] sm:$0xf]
        %v743 = vld [vmem:[%s3 + $0x2c] sm:$0xf]
        %v744 = vld [vmem:[%s3 + $0x30] sm:$0xf]
        %v745 = vld [vmem:[%s3 + $0x34] sm:$0xf]
        %v746 = vld [vmem:[%s3 + $0x38] sm:$0xf]
        %v747 = vld [vmem:[%s3 + $0x3c] sm:$0xf]
        %v748 = vlaneseq
        %v749 = vshrl.u32 %v748, 7
        %v750 = vsub.s32 0, %v749
        %v751 = vrot.slane %v352, %v750
        %v768 = vunpack.c.l.b16 %v732
        %v769 = vunpack.c.l.b16 %v733
        %v770 = vunpack.c.l.b16 %v734
        %v771 = vunpack.c.l.b16 %v735
        %v772 = vunpack.c.l.b16 %v736
        %v773 = vunpack.c.l.b16 %v737
        %v774 = vunpack.c.l.b16 %v738
        %v775 = vunpack.c.l.b16 %v739
        %v776 = vunpack.c.l.b16 %v740
        %v777 = vunpack.c.l.b16 %v741
        %v778 = vunpack.c.l.b16 %v742
        %v779 = vunpack.c.l.b16 %v743
        %v780 = vunpack.c.l.b16 %v744
        %v781 = vunpack.c.l.b16 %v745
        %v782 = vunpack.c.l.b16 %v746
        %v783 = vunpack.c.l.b16 %v747
        %v784 = vpack.c.b16 %v769, %v768
        %v785 = vpack.c.b16 %v771, %v770
        %v786 = vpack.c.b16 %v773, %v772
        %v787 = vpack.c.b16 %v775, %v774
        %v788 = vpack.c.b16 %v777, %v776
        %v789 = vpack.c.b16 %v779, %v778
        %v790 = vpack.c.b16 %v781, %v780
        %v791 = vpack.c.b16 %v783, %v782
        %800 = vmatprep.subr.bf16.mxu0 0
        %801 = vmatpush1.bf16.msra.mxu0 %v784
        %802 = vmatprep.subr.bf16.mxu0 0
        %803 = vmatpush1.bf16.msra.mxu0 %v785
        %804 = vmatprep.subr.bf16.mxu0 0
        %805 = vmatpush1.bf16.msra.mxu0 %v786
        %806 = vmatprep.subr.bf16.mxu0 0
        %807 = vmatpush1.bf16.msra.mxu0 %v787
        %808 = vmatprep.subr.bf16.mxu0 0
        %809 = vmatpush1.bf16.msra.mxu0 %v788
        %810 = vmatprep.subr.bf16.mxu0 0
        %811 = vmatpush1.bf16.msra.mxu0 %v789
        %812 = vmatprep.subr.bf16.mxu0 0
        %813 = vmatpush1.bf16.msra.mxu0 %v790
        %814 = vmatprep.subr.bf16.mxu0 0
        %815 = vmatpush1.bf16.msra.mxu0 %v791
        %816 = vmatprep.subr.bf16.mxu0 0
        %817 = vmatpush1.bf16.msra.mxu0 0
        %818 = vmatprep.subr.bf16.mxu0 0
        %819 = vmatpush1.bf16.msra.mxu0 0
        %820 = vmatprep.subr.bf16.mxu0 0
        %821 = vmatpush1.bf16.msra.mxu0 0
        %822 = vmatprep.subr.bf16.mxu0 0
        %823 = vmatpush1.bf16.msra.mxu0 0
        %824 = vmatprep.subr.bf16.mxu0 0
        %825 = vmatpush1.bf16.msra.mxu0 0
        %826 = vmatprep.subr.bf16.mxu0 0
        %827 = vmatpush1.bf16.msra.mxu0 0
        %828 = vmatprep.subr.bf16.mxu0 0
        %829 = vmatpush1.bf16.msra.mxu0 0
        %830 = vmatprep.subr.bf16.mxu0 0
        %831 = vmatpush1.bf16.msra.mxu0 0
        %832 = vmatprep.mubr.bf16.mxu0 0
        %833 = vmatmul.mubr.bf16.gmra.mrb[0].mxu0 %v724
        %v834 = vpop.f32.mrb[0].mxu0
        %v835 = vadd.f32 %v751, %v834
        %v836 = vpop.f32.mrb[0].mxu0
        %v837 = vpop.f32.mrb[0].mxu0
        %v838 = vadd.f32 %v751, %v837
        %v839 = vpop.f32.mrb[0].mxu0
        %840 = vmatprep.mubr.bf16.mxu0 0
        %841 = vmatmul.mubr.bf16.gmra.mrb[0].mxu0 %v725
        %v842 = vpop.f32.mrb[0].mxu0
        %v843 = vadd.f32 %v751, %v842
        %v844 = vpop.f32.mrb[0].mxu0
        %v845 = vpop.f32.mrb[0].mxu0
        %v846 = vadd.f32 %v751, %v845
        %v847 = vpop.f32.mrb[0].mxu0
        %848 = vmatprep.mubr.bf16.mxu0 0
        %849 = vmatmul.mubr.bf16.gmra.mrb[0].mxu0 %v726
        %v850 = vpop.f32.mrb[0].mxu0
        %v851 = vadd.f32 %v751, %v850
        %v852 = vpop.f32.mrb[0].mxu0
        %v853 = vpop.f32.mrb[0].mxu0
        %v854 = vadd.f32 %v751, %v853
        %v855 = vpop.f32.mrb[0].mxu0
        %856 = vmatprep.mubr.bf16.mxu0 0
        %857 = vmatmul.mubr.bf16.gmra.mrb[0].mxu0 %v727
        %v858 = vpop.f32.mrb[0].mxu0
        %v859 = vadd.f32 %v751, %v858
        %v860 = vpop.f32.mrb[0].mxu0
        %v861 = vpop.f32.mrb[0].mxu0
        %v862 = vadd.f32 %v751, %v861
        %v863 = vpop.f32.mrb[0].mxu0
        %864 = vmatprep.mubr.bf16.mxu0 0
        %865 = vmatmul.mubr.bf16.gmra.mrb[0].mxu0 %v728
        %v866 = vpop.f32.mrb[0].mxu0
        %v867 = vadd.f32 %v751, %v866
        %v868 = vpop.f32.mrb[0].mxu0
        %v869 = vpop.f32.mrb[0].mxu0
        %v870 = vadd.f32 %v751, %v869
        %v871 = vpop.f32.mrb[0].mxu0
        %872 = vmatprep.mubr.bf16.mxu0 0
        %873 = vmatmul.mubr.bf16.gmra.mrb[0].mxu0 %v729
        %v874 = vpop.f32.mrb[0].mxu0
        %v875 = vadd.f32 %v751, %v874
        %v876 = vpop.f32.mrb[0].mxu0
        %v877 = vpop.f32.mrb[0].mxu0
        %v878 = vadd.f32 %v751, %v877
        %v879 = vpop.f32.mrb[0].mxu0
        %880 = vmatprep.mubr.bf16.mxu0 0
        %881 = vmatmul.mubr.bf16.gmra.mrb[0].mxu0 %v730
        %v882 = vpop.f32.mrb[0].mxu0
        %v883 = vadd.f32 %v751, %v882
        %v884 = vpop.f32.mrb[0].mxu0
        %v885 = vpop.f32.mrb[0].mxu0
        %v886 = vadd.f32 %v751, %v885
        %v887 = vpop.f32.mrb[0].mxu0
        %888 = vmatprep.mubr.bf16.mxu0 0
        %889 = vmatmul.mubr.bf16.gmra.mrb[0].mxu0 %v731
        %v890 = vpop.f32.mrb[0].mxu0
        %v891 = vadd.f32 %v751, %v890
        %v892 = vpop.f32.mrb[0].mxu0
        %v893 = vpop.f32.mrb[0].mxu0
        %v894 = vadd.f32 %v751, %v893
        %v895 = vpop.f32.mrb[0].mxu0
        %896 = vdwg.mxu0
        %897 = vadd.xlane.f32.xlu0 %v835
        %v898 = vpop.xlane.xlu0 %897
        %899 = vadd.xlane.f32.xlu0 %v838
        %v900 = vpop.xlane.xlu0 %899
        %901 = vadd.xlane.f32.xlu0 %v843
        %v902 = vpop.xlane.xlu0 %901
        %903 = vadd.xlane.f32.xlu0 %v846
        %v904 = vpop.xlane.xlu0 %903
        %905 = vadd.xlane.f32.xlu0 %v851
        %v906 = vpop.xlane.xlu0 %905
        %907 = vadd.xlane.f32.xlu0 %v854
        %v908 = vpop.xlane.xlu0 %907
        %909 = vadd.xlane.f32.xlu0 %v859
        %v910 = vpop.xlane.xlu0 %909
        %911 = vadd.xlane.f32.xlu0 %v862
        %v912 = vpop.xlane.xlu0 %911
        %913 = vadd.xlane.f32.xlu0 %v867
        %v914 = vpop.xlane.xlu0 %913
        %915 = vadd.xlane.f32.xlu0 %v870
        %v916 = vpop.xlane.xlu0 %915
        %917 = vadd.xlane.f32.xlu0 %v875
        %v918 = vpop.xlane.xlu0 %917
        %919 = vadd.xlane.f32.xlu0 %v878
        %v920 = vpop.xlane.xlu0 %919
        %921 = vadd.xlane.f32.xlu0 %v883
        %v922 = vpop.xlane.xlu0 %921
        %923 = vadd.xlane.f32.xlu0 %v886
        %v924 = vpop.xlane.xlu0 %923
        %925 = vadd.xlane.f32.xlu0 %v891
        %v926 = vpop.xlane.xlu0 %925
        %927 = vadd.xlane.f32.xlu0 %v894
        %v928 = vpop.xlane.xlu0 %927
        %v929 = vmul.f32 %v898, %v523
        %v930 = vmul.f32 %v900, %v523
        %v931 = vmul.f32 %v902, %v523
        %v932 = vmul.f32 %v904, %v523
        %v933 = vmul.f32 %v906, %v523
        %v934 = vmul.f32 %v908, %v523
        %v935 = vmul.f32 %v910, %v523
        %v936 = vmul.f32 %v912, %v523
        %v937 = vmul.f32 %v914, %v523
        %v938 = vmul.f32 %v916, %v523
        %v939 = vmul.f32 %v918, %v523
        %v940 = vmul.f32 %v920, %v523
        %v941 = vmul.f32 %v922, %v523
        %v942 = vmul.f32 %v924, %v523
        %v943 = vmul.f32 %v926, %v523
        %v944 = vmul.f32 %v928, %v523
        %v945 = vsub.f32 %v835, %v929
        %v946 = vsub.f32 %v838, %v930
        %v947 = vsub.f32 %v843, %v931
        %v948 = vsub.f32 %v846, %v932
        %v949 = vsub.f32 %v851, %v933
        %v950 = vsub.f32 %v854, %v934
        %v951 = vsub.f32 %v859, %v935
        %v952 = vsub.f32 %v862, %v936
        %v953 = vsub.f32 %v867, %v937
        %v954 = vsub.f32 %v870, %v938
        %v955 = vsub.f32 %v875, %v939
        %v956 = vsub.f32 %v878, %v940
        %v957 = vsub.f32 %v883, %v941
        %v958 = vsub.f32 %v886, %v942
        %v959 = vsub.f32 %v891, %v943
        %v960 = vsub.f32 %v894, %v944
        %v961 = vmul.f32 %v945, %v945
        %v962 = vmul.f32 %v946, %v946
        %v963 = vmul.f32 %v947, %v947
        %v964 = vmul.f32 %v948, %v948
        %v965 = vmul.f32 %v949, %v949
        %v966 = vmul.f32 %v950, %v950
        %v967 = vmul.f32 %v951, %v951
        %v968 = vmul.f32 %v952, %v952
        %v969 = vmul.f32 %v953, %v953
        %v970 = vmul.f32 %v954, %v954
        %v971 = vmul.f32 %v955, %v955
        %v972 = vmul.f32 %v956, %v956
        %v973 = vmul.f32 %v957, %v957
        %v974 = vmul.f32 %v958, %v958
        %v975 = vmul.f32 %v959, %v959
        %v976 = vmul.f32 %v960, %v960
        %977 = vadd.xlane.f32.xlu0 %v961
        %v978 = vpop.xlane.xlu0 %977
        %979 = vadd.xlane.f32.xlu0 %v962
        %v980 = vpop.xlane.xlu0 %979
        %981 = vadd.xlane.f32.xlu0 %v963
        %v982 = vpop.xlane.xlu0 %981
        %983 = vadd.xlane.f32.xlu0 %v964
        %v984 = vpop.xlane.xlu0 %983
        %985 = vadd.xlane.f32.xlu0 %v965
        %v986 = vpop.xlane.xlu0 %985
        %987 = vadd.xlane.f32.xlu0 %v966
        %v988 = vpop.xlane.xlu0 %987
        %989 = vadd.xlane.f32.xlu0 %v967
        %v990 = vpop.xlane.xlu0 %989
        %991 = vadd.xlane.f32.xlu0 %v968
        %v992 = vpop.xlane.xlu0 %991
        %993 = vadd.xlane.f32.xlu0 %v969
        %v994 = vpop.xlane.xlu0 %993
        %995 = vadd.xlane.f32.xlu0 %v970
        %v996 = vpop.xlane.xlu0 %995
        %997 = vadd.xlane.f32.xlu0 %v971
        %v998 = vpop.xlane.xlu0 %997
        %999 = vadd.xlane.f32.xlu0 %v972
        %v1000 = vpop.xlane.xlu0 %999
        %1001 = vadd.xlane.f32.xlu0 %v973
        %v1002 = vpop.xlane.xlu0 %1001
        %1003 = vadd.xlane.f32.xlu0 %v974
        %v1004 = vpop.xlane.xlu0 %1003
        %1005 = vadd.xlane.f32.xlu0 %v975
        %v1006 = vpop.xlane.xlu0 %1005
        %1007 = vadd.xlane.f32.xlu0 %v976
        %v1008 = vpop.xlane.xlu0 %1007
        %v1009 = vmul.f32 %v978, %v523
        %v1010 = vmul.f32 %v980, %v523
        %v1011 = vmul.f32 %v982, %v523
        %v1012 = vmul.f32 %v984, %v523
        %v1013 = vmul.f32 %v986, %v523
        %v1014 = vmul.f32 %v988, %v523
        %v1015 = vmul.f32 %v990, %v523
        %v1016 = vmul.f32 %v992, %v523
        %v1017 = vmul.f32 %v994, %v523
        %v1018 = vmul.f32 %v996, %v523
        %v1019 = vmul.f32 %v998, %v523
        %v1020 = vmul.f32 %v1000, %v523
        %v1021 = vmul.f32 %v1002, %v523
        %v1022 = vmul.f32 %v1004, %v523
        %v1023 = vmul.f32 %v1006, %v523
        %v1024 = vmul.f32 %v1008, %v523
        %v1025 = vadd.f32 %v1009, 1e-05
        %v1026 = vadd.f32 %v1010, 1e-05
        %v1027 = vadd.f32 %v1011, 1e-05
        %v1028 = vadd.f32 %v1012, 1e-05
        %v1029 = vadd.f32 %v1013, 1e-05
        %v1030 = vadd.f32 %v1014, 1e-05
        %v1031 = vadd.f32 %v1015, 1e-05
        %v1032 = vadd.f32 %v1016, 1e-05
        %v1033 = vadd.f32 %v1017, 1e-05
        %v1034 = vadd.f32 %v1018, 1e-05
        %v1035 = vadd.f32 %v1019, 1e-05
        %v1036 = vadd.f32 %v1020, 1e-05
        %v1037 = vadd.f32 %v1021, 1e-05
        %v1038 = vadd.f32 %v1022, 1e-05
        %v1039 = vadd.f32 %v1023, 1e-05
        %v1040 = vadd.f32 %v1024, 1e-05
        %v1041 = vrsqrt.pop %v1025
        %v1042 = vrsqrt.pop %v1026
        %v1043 = vrsqrt.pop %v1027
        %v1044 = vrsqrt.pop %v1028
        %v1045 = vrsqrt.pop %v1029
        %v1046 = vrsqrt.pop %v1030
        %v1047 = vrsqrt.pop %v1031
        %v1048 = vrsqrt.pop %v1032
        %v1049 = vrsqrt.pop %v1033
        %v1050 = vrsqrt.pop %v1034
        %v1051 = vrsqrt.pop %v1035
        %v1052 = vrsqrt.pop %v1036
        %v1053 = vrsqrt.pop %v1037
        %v1054 = vrsqrt.pop %v1038
        %v1055 = vrsqrt.pop %v1039
        %v1056 = vrsqrt.pop %v1040
        %v1057 = vmul.f32 %v945, %v1041
        %v1058 = vmul.f32 %v946, %v1042
        %v1059 = vmul.f32 %v947, %v1043
        %v1060 = vmul.f32 %v948, %v1044
        %v1061 = vmul.f32 %v949, %v1045
        %v1062 = vmul.f32 %v950, %v1046
        %v1063 = vmul.f32 %v951, %v1047
        %v1064 = vmul.f32 %v952, %v1048
        %v1065 = vmul.f32 %v953, %v1049
        %v1066 = vmul.f32 %v954, %v1050
        %v1067 = vmul.f32 %v955, %v1051
        %v1068 = vmul.f32 %v956, %v1052
        %v1069 = vmul.f32 %v957, %v1053
        %v1070 = vmul.f32 %v958, %v1054
        %v1071 = vmul.f32 %v959, %v1055
        %v1072 = vmul.f32 %v960, %v1056
        %v1073 = vlaneseq
        %v1074 = vshrl.u32 %v1073, 7
        %v1075 = vsub.s32 0, %v1074
        %v1076 = vrot.slane %v353, %v1075
        %v1077 = vmul.f32 %v1057, %v1076
        %v1078 = vmul.f32 %v1058, %v1076
        %v1079 = vmul.f32 %v1059, %v1076
        %v1080 = vmul.f32 %v1060, %v1076
        %v1081 = vmul.f32 %v1061, %v1076
        %v1082 = vmul.f32 %v1062, %v1076
        %v1083 = vmul.f32 %v1063, %v1076
        %v1084 = vmul.f32 %v1064, %v1076
        %v1085 = vmul.f32 %v1065, %v1076
        %v1086 = vmul.f32 %v1066, %v1076
        %v1087 = vmul.f32 %v1067, %v1076
        %v1088 = vmul.f32 %v1068, %v1076
        %v1089 = vmul.f32 %v1069, %v1076
        %v1090 = vmul.f32 %v1070, %v1076
        %v1091 = vmul.f32 %v1071, %v1076
        %v1092 = vmul.f32 %v1072, %v1076
        %v1093 = vlaneseq
        %v1094 = vshrl.u32 %v1093, 7
        %v1095 = vsub.s32 0, %v1094
        %v1096 = vrot.slane %v354, %v1095
        %v1097 = vadd.f32 %v1077, %v1096
        %v1098 = vadd.f32 %v1078, %v1096
        %v1099 = vadd.f32 %v1079, %v1096
        %v1100 = vadd.f32 %v1080, %v1096
        %v1101 = vadd.f32 %v1081, %v1096
        %v1102 = vadd.f32 %v1082, %v1096
        %v1103 = vadd.f32 %v1083, %v1096
        %v1104 = vadd.f32 %v1084, %v1096
        %v1105 = vadd.f32 %v1085, %v1096
        %v1106 = vadd.f32 %v1086, %v1096
        %v1107 = vadd.f32 %v1087, %v1096
        %v1108 = vadd.f32 %v1088, %v1096
        %v1109 = vadd.f32 %v1089, %v1096
        %v1110 = vadd.f32 %v1090, %v1096
        %v1111 = vadd.f32 %v1091, %v1096
        %v1112 = vadd.f32 %v1092, %v1096
        %v1113 = vld [vmem:[%s4] sm:$0xf]
        %v1114 = vlaneseq
        %v1115 = vshrl.u32 %v1114, 7
        %v1116 = vsub.s32 0, %v1115
        %v1117 = vrot.slane %v355, %v1116
        %vm1118 = vcmask 64512
        %v1120 = vsel %vm1118, %v341, 0
        %v1123 = vsel %vm1118, %v342, 0
        %v1126 = vsel %vm1118, %v343, 0
        %v1129 = vsel %vm1118, %v344, 0
        %v1132 = vsel %vm1118, %v345, 0
        %v1135 = vsel %vm1118, %v346, 0
        %v1138 = vsel %vm1118, %v347, 0
        %v1141 = vsel %vm1118, %v348, 0
        %vm1143 = vcmask 1043456
        %v1145 = vsel %vm1143, %v1113, 0
        %1147 = vmatprep.subr.bf16.mxu0 0
        %1148 = vmatpush1.bf16.msra.mxu0 %v1145
        %1149 = vmatprep.subr.bf16.mxu0 0
        %1150 = vmatpush1.bf16.msra.mxu0 0
        %1151 = vmatprep.subr.bf16.mxu0 0
        %1152 = vmatpush1.bf16.msra.mxu0 0
        %1153 = vmatprep.subr.bf16.mxu0 0
        %1154 = vmatpush1.bf16.msra.mxu0 0
        %1155 = vmatprep.subr.bf16.mxu0 0
        %1156 = vmatpush1.bf16.msra.mxu0 0
        %1157 = vmatprep.subr.bf16.mxu0 0
        %1158 = vmatpush1.bf16.msra.mxu0 0
        %1159 = vmatprep.subr.bf16.mxu0 0
        %1160 = vmatpush1.bf16.msra.mxu0 0
        %1161 = vmatprep.subr.bf16.mxu0 0
        %1162 = vmatpush1.bf16.msra.mxu0 0
        %1163 = vmatprep.subr.bf16.mxu0 0
        %1164 = vmatpush1.bf16.msra.mxu0 0
        %1165 = vmatprep.subr.bf16.mxu0 0
        %1166 = vmatpush1.bf16.msra.mxu0 0
        %1167 = vmatprep.subr.bf16.mxu0 0
        %1168 = vmatpush1.bf16.msra.mxu0 0
        %1169 = vmatprep.subr.bf16.mxu0 0
        %1170 = vmatpush1.bf16.msra.mxu0 0
        %1171 = vmatprep.subr.bf16.mxu0 0
        %1172 = vmatpush1.bf16.msra.mxu0 0
        %1173 = vmatprep.subr.bf16.mxu0 0
        %1174 = vmatpush1.bf16.msra.mxu0 0
        %1175 = vmatprep.subr.bf16.mxu0 0
        %1176 = vmatpush1.bf16.msra.mxu0 0
        %1177 = vmatprep.subr.bf16.mxu0 0
        %1178 = vmatpush1.bf16.msra.mxu0 0
        %1179 = vmatprep.mubr.bf16.mxu0 0
        %1180 = vmatmul.mubr.bf16.gmra.mrb[0].mxu0 %v1120
        %v1181 = vpop.f32.mrb[0].mxu0
        %v1182 = vadd.f32 %v1117, %v1181
        %v1183 = vpop.f32.mrb[0].mxu0
        %v1184 = vpop.f32.mrb[0].mxu0
        %v1185 = vadd.f32 %v1117, %v1184
        %v1186 = vpop.f32.mrb[0].mxu0
        %1187 = vmatprep.mubr.bf16.mxu0 0
        %1188 = vmatmul.mubr.bf16.gmra.mrb[0].mxu0 %v1123
        %v1189 = vpop.f32.mrb[0].mxu0
        %v1190 = vadd.f32 %v1117, %v1189
        %v1191 = vpop.f32.mrb[0].mxu0
        %v1192 = vpop.f32.mrb[0].mxu0
        %v1193 = vadd.f32 %v1117, %v1192
        %v1194 = vpop.f32.mrb[0].mxu0
        %1195 = vmatprep.mubr.bf16.mxu0 0
        %1196 = vmatmul.mubr.bf16.gmra.mrb[0].mxu0 %v1126
        %v1197 = vpop.f32.mrb[0].mxu0
        %v1198 = vadd.f32 %v1117, %v1197
        %v1199 = vpop.f32.mrb[0].mxu0
        %v1200 = vpop.f32.mrb[0].mxu0
        %v1201 = vadd.f32 %v1117, %v1200
        %v1202 = vpop.f32.mrb[0].mxu0
        %1203 = vmatprep.mubr.bf16.mxu0 0
        %1204 = vmatmul.mubr.bf16.gmra.mrb[0].mxu0 %v1129
        %v1205 = vpop.f32.mrb[0].mxu0
        %v1206 = vadd.f32 %v1117, %v1205
        %v1207 = vpop.f32.mrb[0].mxu0
        %v1208 = vpop.f32.mrb[0].mxu0
        %v1209 = vadd.f32 %v1117, %v1208
        %v1210 = vpop.f32.mrb[0].mxu0
        %1211 = vmatprep.mubr.bf16.mxu0 0
        %1212 = vmatmul.mubr.bf16.gmra.mrb[0].mxu0 %v1132
        %v1213 = vpop.f32.mrb[0].mxu0
        %v1214 = vadd.f32 %v1117, %v1213
        %v1215 = vpop.f32.mrb[0].mxu0
        %v1216 = vpop.f32.mrb[0].mxu0
        %v1217 = vadd.f32 %v1117, %v1216
        %v1218 = vpop.f32.mrb[0].mxu0
        %1219 = vmatprep.mubr.bf16.mxu0 0
        %1220 = vmatmul.mubr.bf16.gmra.mrb[0].mxu0 %v1135
        %v1221 = vpop.f32.mrb[0].mxu0
        %v1222 = vadd.f32 %v1117, %v1221
        %v1223 = vpop.f32.mrb[0].mxu0
        %v1224 = vpop.f32.mrb[0].mxu0
        %v1225 = vadd.f32 %v1117, %v1224
        %v1226 = vpop.f32.mrb[0].mxu0
        %1227 = vmatprep.mubr.bf16.mxu0 0
        %1228 = vmatmul.mubr.bf16.gmra.mrb[0].mxu0 %v1138
        %v1229 = vpop.f32.mrb[0].mxu0
        %v1230 = vadd.f32 %v1117, %v1229
        %v1231 = vpop.f32.mrb[0].mxu0
        %v1232 = vpop.f32.mrb[0].mxu0
        %v1233 = vadd.f32 %v1117, %v1232
        %v1234 = vpop.f32.mrb[0].mxu0
        %1235 = vmatprep.mubr.bf16.mxu0 0
        %1236 = vmatmul.mubr.bf16.gmra.mrb[0].mxu0 %v1141
        %v1237 = vpop.f32.mrb[0].mxu0
        %v1238 = vadd.f32 %v1117, %v1237
        %v1239 = vpop.f32.mrb[0].mxu0
        %v1240 = vpop.f32.mrb[0].mxu0
        %v1241 = vadd.f32 %v1117, %v1240
        %v1242 = vpop.f32.mrb[0].mxu0
        %1243 = vdwg.mxu0
        %v1244 = vmax.f32 %v1182, 0.0
        %v1245 = vmax.f32 %v1185, 0.0
        %v1246 = vmax.f32 %v1190, 0.0
        %v1247 = vmax.f32 %v1193, 0.0
        %v1248 = vmax.f32 %v1198, 0.0
        %v1249 = vmax.f32 %v1201, 0.0
        %v1250 = vmax.f32 %v1206, 0.0
        %v1251 = vmax.f32 %v1209, 0.0
        %v1252 = vmax.f32 %v1214, 0.0
        %v1253 = vmax.f32 %v1217, 0.0
        %v1254 = vmax.f32 %v1222, 0.0
        %v1255 = vmax.f32 %v1225, 0.0
        %v1256 = vmax.f32 %v1230, 0.0
        %v1257 = vmax.f32 %v1233, 0.0
        %v1258 = vmax.f32 %v1238, 0.0
        %v1259 = vmax.f32 %v1241, 0.0
        %v1260 = vadd.f32 %v1097, %v1244
        %v1261 = vadd.f32 %v1098, %v1245
        %v1262 = vadd.f32 %v1099, %v1246
        %v1263 = vadd.f32 %v1100, %v1247
        %v1264 = vadd.f32 %v1101, %v1248
        %v1265 = vadd.f32 %v1102, %v1249
        %v1266 = vadd.f32 %v1103, %v1250
        %v1267 = vadd.f32 %v1104, %v1251
        %v1268 = vadd.f32 %v1105, %v1252
        %v1269 = vadd.f32 %v1106, %v1253
        %v1270 = vadd.f32 %v1107, %v1254
        %v1271 = vadd.f32 %v1108, %v1255
        %v1272 = vadd.f32 %v1109, %v1256
        %v1273 = vadd.f32 %v1110, %v1257
        %v1274 = vadd.f32 %v1111, %v1258
        %v1275 = vadd.f32 %v1112, %v1259
        %v1276 = vmax.f32 %v1260, 0.0
        %v1277 = vmax.f32 %v1261, 0.0
        %v1278 = vmax.f32 %v1262, 0.0
        %v1279 = vmax.f32 %v1263, 0.0
        %v1280 = vmax.f32 %v1264, 0.0
        %v1281 = vmax.f32 %v1265, 0.0
        %v1282 = vmax.f32 %v1266, 0.0
        %v1283 = vmax.f32 %v1267, 0.0
        %v1284 = vmax.f32 %v1268, 0.0
        %v1285 = vmax.f32 %v1269, 0.0
        %v1286 = vmax.f32 %v1270, 0.0
        %v1287 = vmax.f32 %v1271, 0.0
        %v1288 = vmax.f32 %v1272, 0.0
        %v1289 = vmax.f32 %v1273, 0.0
        %v1290 = vmax.f32 %v1274, 0.0
        %v1291 = vmax.f32 %v1275, 0.0
        %v1292 = vld [vmem:[%s6] sm:$0xff]
        %1293 = vmatprep.subr.mxu0 0.0
        %1294 = vmatpush1.xpose.msra.mxu0 %v1276
        %1295 = vmatprep.subr.mxu0 0.0
        %1296 = vmatpush1.xpose.msra.mxu0 %v1277
        %1297 = vmatprep.subr.mxu0 0.0
        %1298 = vmatpush1.xpose.msra.mxu0 %v1278
        %1299 = vmatprep.subr.mxu0 0.0
        %1300 = vmatpush1.xpose.msra.mxu0 %v1279
        %1301 = vmatprep.subr.mxu0 0.0
        %1302 = vmatpush1.xpose.msra.mxu0 %v1280
        %1303 = vmatprep.subr.mxu0 0.0
        %1304 = vmatpush1.xpose.msra.mxu0 %v1281
        %1305 = vmatprep.subr.mxu0 0.0
        %1306 = vmatpush1.xpose.msra.mxu0 %v1282
        %1307 = vmatprep.subr.mxu0 0.0
        %1308 = vmatpush1.xpose.msra.mxu0 %v1283
        %1309 = vmatprep.subr.mxu0 0.0
        %1310 = vmatpush1.xpose.msra.mxu0 %v1284
        %1311 = vmatprep.subr.mxu0 0.0
        %1312 = vmatpush1.xpose.msra.mxu0 %v1285
        %1313 = vmatprep.subr.mxu0 0.0
        %1314 = vmatpush1.xpose.msra.mxu0 %v1286
        %1315 = vmatprep.subr.mxu0 0.0
        %1316 = vmatpush1.xpose.msra.mxu0 %v1287
        %1317 = vmatprep.subr.mxu0 0.0
        %1318 = vmatpush1.xpose.msra.mxu0 %v1288
        %1319 = vmatprep.subr.mxu0 0.0
        %1320 = vmatpush1.xpose.msra.mxu0 %v1289
        %1321 = vmatprep.subr.mxu0 0.0
        %1322 = vmatpush1.xpose.msra.mxu0 %v1290
        %1323 = vmatprep.subr.mxu0 0.0
        %1324 = vmatpush1.xpose.msra.mxu0 %v1291
        %1325 = vmatprep.subr.mxu0 0.0
        %1326 = vmatpush1.xpose.msra.mxu0 0.0
        %1327 = vmatprep.subr.mxu0 0.0
        %1328 = vmatpush1.xpose.msra.mxu0 0.0
        %1329 = vmatprep.subr.mxu0 0.0
        %1330 = vmatpush1.xpose.msra.mxu0 0.0
        %1331 = vmatprep.subr.mxu0 0.0
        %1332 = vmatpush1.xpose.msra.mxu0 0.0
        %1333 = vmatprep.subr.mxu0 0.0
        %1334 = vmatpush1.xpose.msra.mxu0 0.0
        %1335 = vmatprep.subr.mxu0 0.0
        %1336 = vmatpush1.xpose.msra.mxu0 0.0
        %1337 = vmatprep.subr.mxu0 0.0
        %1338 = vmatpush1.xpose.msra.mxu0 0.0
        %1339 = vmatprep.subr.mxu0 0.0
        %1340 = vmatpush1.xpose.msra.mxu0 0.0
        %1341 = vmatprep.subr.mxu0 0.0
        %1342 = vmatpush1.xpose.msra.mxu0 0.0
        %1343 = vmatprep.subr.mxu0 0.0
        %1344 = vmatpush1.xpose.msra.mxu0 0.0
        %1345 = vmatprep.subr.mxu0 0.0
        %1346 = vmatpush1.xpose.msra.mxu0 0.0
        %1347 = vmatprep.subr.mxu0 0.0
        %1348 = vmatpush1.xpose.msra.mxu0 0.0
        %1349 = vmatprep.subr.mxu0 0.0
        %1350 = vmatpush1.xpose.msra.mxu0 0.0
        %1351 = vmatprep.subr.mxu0 0.0
        %1352 = vmatpush1.xpose.msra.mxu0 0.0
        %1353 = vmatprep.subr.mxu0 0.0
        %1354 = vmatpush1.xpose.msra.mxu0 0.0
        %1355 = vmatprep.subr.mxu0 0.0
        %1356 = vmatpush1.xpose.msra.mxu0 0.0
        %1357 = vmatprep.mubr.f32.mxu0 0.0
        %1358 = vmatmul.mubr.f32.gmra.mrb[0].mxu0 %v1292
        %v1359 = vpop.f32.mrb[0].mxu0
        %v1360 = vadd.f32 0.0, %v1359
        %v1361 = vpop.f32.mrb[0].mxu0
        %1362 = vdwg.mxu0
        %1364 = vset.pattern.permute.xlu0 0
        %1365 = vperm.xlu0 %1364, %v356
        %v1366 = vpop.permute.xlu0 %1365
        %v1367 = vrot.slane %v1366, 4
        %v1369 = vadd.f32 %v1360, %v1367
        %1370 = vst [vmem:[%s287 - $0x4] sm:$0x10] %v1369
        %s1371 = sand.u32 %s186, 1
        %s1372 = scalar_lea.sflag [#allocation3], %s1371
        %s1373 = sand.u32 %s186, 1
        %s1374 = scalar_lea.vmem [#allocation2], %s1373
        // Predicated region
        $region49: #{tpu_custom_call.1} parent=47 // pred_check
          %p1375 = pneg %p196
        $region50: #{tpu_custom_call.1} parent=47 // pred_check_branch
          %1377 = sbr.rel (%p1375) target = $region52
        $region51: #{tpu_custom_call.1} parent=47 // pred_region
          %s1379 = ssub.s32 16, 16
          %1380 = vsyncadd %s1372, %s1379
          %s1381 = smul.addr %s21, 16
          %s1382 = scalar_lea.hbm %s7, %s1381
          %s1384 = sshll.u32 %s1374, 4
          %s1385 = int_to_ptr.vmem [resolvable:$true] %s1384
          %1387 = dma.vmem_to_hbm [thread:$0]  %s1385, 16, %s1382, %s1372
        $region52: #{tpu_custom_call.1} parent=47 // pred_fallthru
          _
      $region48: #{tpu_custom_call.1} parent=5 // pred_fallthru
        _
      %p1388 = scmp.le.s32.totalorder 2, %s16
      // Predicated region
      $region53: #{tpu_custom_call.1} parent=5 // pred_check
        %p1389 = pneg %p1388
      $region54: #{tpu_custom_call.1} parent=5 // pred_check_branch
        %1391 = sbr.rel (%p1389) target = $region56
      $region55: #{tpu_custom_call.1} parent=5 // pred_region
        %s1392 = ssub.s32 %s16, 2
        // Predicated region
        $region57: #{tpu_custom_call.1} parent=55 // pred_check
          %p1393 = pneg %p202
        $region58: #{tpu_custom_call.1} parent=55 // pred_check_branch
          %1395 = sbr.rel (%p1393) target = $region60
        $region59: #{tpu_custom_call.1} parent=55 // pred_region
          %s1396 = sand.u32 %s187, 1
          %s1397 = scalar_lea.sflag [#allocation3], %s1396
          %s1398 = sand.u32 %s187, 1
          %s1399 = scalar_lea.vmem [#allocation2], %s1398
          %1400 = dma.done %s1397, 16
        $region60: #{tpu_custom_call.1} parent=55 // pred_fallthru
          _
      $region56: #{tpu_custom_call.1} parent=5 // pred_fallthru
        _
    $region6: #{tpu_custom_call.1} parent=1 // loop_footer
      %s20 = sadd.s32 1, %s16
    $region7: #{tpu_custom_call.1} parent=1 // loop_footer_branch
      %15 = sbr.rel target = $region3
    $region8: #{tpu_custom_call.1} parent=1 // loop_exit
      _
    %1401 = vsyncpa [#allocation3], 1
    %s1402 = scalar_lea.sflag [#allocation3], 1
    %1403 = vsyncpa %s1402, 1

</llo_original>
